<compile_context>
chip_gen: v7x
topology: tpu7x:2x2x1
jax: 0.10.0
libtpu: 0.0.40
codegen_flags: <defaults>
</compile_context>

<pallas_src>
import functools

import jax
import jax.numpy as jnp
from jax.experimental import pallas as pl
from jax.experimental.pallas import tpu as pltpu


_K_COLLAPSE = 8192   # collapse the K grid axis below this many K elements


def _round_up(x, m):
    return ((x + m - 1) // m) * m


@functools.lru_cache(maxsize=1)
def _device_kind():
    try:
        return jax.devices()[0].device_kind.lower()
    except Exception:
        return ""


def _preferred_tm():
    """Row tile: 128 on v5e and older (4x128 MXU), 256 on v6e/v7x."""
    kind = _device_kind()
    for tag in ("v2", "v3", "v4", "v5"):
        if tag in kind:
            return 128
    return 256


def _vmem_limit():
    """Scoped VMEM: ~100 MiB on v5e/v6e (128 MiB physical), 48 MiB on v7x."""
    kind = _device_kind()
    for tag in ("v2", "v3", "v4", "v5", "v6"):
        if tag in kind:
            return 100 * 1024 * 1024
    return 48 * 1024 * 1024


# ----------------------------------------------------------------------------
# Kernel 1: conv GEMM (im2col'd) with fused f32 epilogue:
#   mode = "none" | "lrelu" | "in_lrelu" (per-sample InstanceNorm + LeakyReLU)
# ----------------------------------------------------------------------------
def _gemm_epilogue(y, mode):
    if mode == "lrelu":
        return jnp.where(y > 0, y, 0.2 * y)
    if mode == "in_lrelu":
        # InstanceNorm2d(affine=False, eps=1e-5) over this block's rows (= one
        # sample's H*W positions), then LeakyReLU(0.2).  Zero-padded output
        # lanes give mean=var=0 -> 0 (sliced away by the caller, no NaNs).
        mean = jnp.mean(y, axis=0, keepdims=True)
        yc = y - mean
        var = jnp.mean(yc * yc, axis=0, keepdims=True)   # biased, like PyTorch
        z = yc * jax.lax.rsqrt(var + 1e-5)
        return jnp.where(z > 0, z, 0.2 * z)
    return y


def _gemm_kernel(x_ref, w_ref, b_ref, o_ref, *, mode):
    y = jnp.dot(x_ref[...], w_ref[...], preferred_element_type=jnp.float32)
    o_ref[...] = _gemm_epilogue(y + b_ref[...], mode).astype(o_ref.dtype)


def _gemm_kernel_ktiled(x_ref, w_ref, b_ref, o_ref, acc_ref, *, mode):
    p = jnp.dot(x_ref[...], w_ref[...], preferred_element_type=jnp.float32)
    k = pl.program_id(2)

    @pl.when(k == 0)
    def _():
        acc_ref[...] = p

    @pl.when(k != 0)
    def _():
        acc_ref[...] += p

    @pl.when(k == pl.num_programs(2) - 1)
    def _():
        o_ref[...] = _gemm_epilogue(acc_ref[...] + b_ref[...], mode).astype(
            o_ref.dtype
        )


def conv_gemm(xcol, w_pad, b_pad, *, mode, out_dtype, tm):
    """xcol: (M, Kpad) bf16 with M % tm == 0; w_pad: (Kpad, Npad) bf16;
    b_pad: (1, Npad) f32.  Returns (M, Npad) of out_dtype."""
    M, Kpad = xcol.shape
    _, Npad = w_pad.shape
    tn = 256 if Npad % 256 == 0 else 128

    if Kpad <= _K_COLLAPSE:
        # Single K block: no scratch, no init/finalize.  Weight/bias block
        # indices depend only on the slow grid axis -> fetched once per
        # column tile and VMEM-resident across all row tiles.
        # TODO(synk): on v7x consider pipeline_mode=pl.Buffered(3) on the x
        #             spec if the single-input DMA ever becomes exposed.
        return pl.pallas_call(
            functools.partial(_gemm_kernel, mode=mode),
            out_shape=jax.ShapeDtypeStruct((M, Npad), out_dtype),
            grid=(Npad // tn, M // tm),
            in_specs=[
                pl.BlockSpec((tm, Kpad), lambda j, i: (i, 0)),
                pl.BlockSpec((Kpad, tn), lambda j, i: (0, j)),
                pl.BlockSpec((1, tn), lambda j, i: (0, j)),
            ],
            out_specs=pl.BlockSpec((tm, tn), lambda j, i: (i, j)),
            compiler_params=pltpu.CompilerParams(
                dimension_semantics=("parallel", "parallel"),
                vmem_limit_bytes=_vmem_limit(),
            ),
        )(xcol, w_pad, b_pad)

    tk = next(t for t in (2048, 1024, 512, 256, 128) if Kpad % t == 0)
    return pl.pallas_call(
        functools.partial(_gemm_kernel_ktiled, mode=mode),
        out_shape=jax.ShapeDtypeStruct((M, Npad), out_dtype),
        grid=(Npad // tn, M // tm, Kpad // tk),
        in_specs=[
            pl.BlockSpec((tm, tk), lambda j, i, k: (i, k)),
            pl.BlockSpec((tk, tn), lambda j, i, k: (k, j)),
            pl.BlockSpec((1, tn), lambda j, i, k: (0, j)),
        ],
        out_specs=pl.BlockSpec((tm, tn), lambda j, i, k: (i, j)),
        scratch_shapes=[pltpu.VMEM((tm, tn), jnp.float32)],
        compiler_params=pltpu.CompilerParams(
            dimension_semantics=("parallel", "parallel", "arbitrary"),
            vmem_limit_bytes=_vmem_limit(),
        ),
    )(xcol, w_pad, b_pad)


# ----------------------------------------------------------------------------
# Kernel 2 (fallback): standalone InstanceNorm2d(affine=False) + LeakyReLU(0.2)
# bf16 in/out, f32 statistics.  Used only when the fused epilogue is illegal
# (per-sample rows not a multiple of 8, or whole-sample tile too big).
# ----------------------------------------------------------------------------
def _instnorm_lrelu_kernel(x_ref, o_ref, *, eps):
    x = x_ref[...].astype(jnp.float32)                   # (1, H*W, C)
    mean = jnp.mean(x, axis=1, keepdims=True)
    xc = x - mean
    var = jnp.mean(xc * xc, axis=1, keepdims=True)
    y = xc * jax.lax.rsqrt(var + eps)
    o_ref[...] = jnp.where(y > 0, y, 0.2 * y).astype(o_ref.dtype)


def instnorm_lrelu(x_nhwc, eps=1e-5):
    N, H, W, C = x_nhwc.shape
    x = x_nhwc.reshape(N, H * W, C)
    out = pl.pallas_call(
        functools.partial(_instnorm_lrelu_kernel, eps=eps),
        out_shape=jax.ShapeDtypeStruct((N, H * W, C), x.dtype),
        grid=(N,),
        in_specs=[pl.BlockSpec((1, H * W, C), lambda n: (n, 0, 0))],
        out_specs=pl.BlockSpec((1, H * W, C), lambda n: (n, 0, 0)),
        compiler_params=pltpu.CompilerParams(
            dimension_semantics=("parallel",),
            vmem_limit_bytes=_vmem_limit(),
        ),
    )(x)
    return out.reshape(N, H, W, C)


# ----------------------------------------------------------------------------
# Kernel 3: AvgPool2d(3, stride=2, pad=1, count_include_pad=False).
# Wrapper only splits the zero-padded image into even/odd row/col planes
# (pure data movement, ~1x image); the kernel sums the nine taps with
# unit-stride slices and multiplies by the analytic 1/valid-count map.
# ----------------------------------------------------------------------------
def _avgpool_kernel(p_ref, inv_ref, o_ref, *, Ho, Wo):
    # p_ref block: (1, 4, Ho+1, Wo+1, C) = [ee, eo, oe, oo] planes.
    def ee(r, c):
        return p_ref[0, 0, r:r + Ho, c:c + Wo, :]

    def eo(r):
        return p_ref[0, 1, r:r + Ho, 0:Wo, :]

    def oe(c):
        return p_ref[0, 2, 0:Ho, c:c + Wo, :]

    oo = p_ref[0, 3, 0:Ho, 0:Wo, :]
    s = (ee(0, 0) + ee(0, 1) + ee(1, 0) + ee(1, 1)
         + eo(0) + eo(1) + oe(0) + oe(1) + oo)
    o_ref[0, :, :, :] = (s * inv_ref[...]).astype(o_ref.dtype)


def _avgpool_inv_counts(H, W):
    """Analytic 1/(# valid taps) for k=3, s=2, p=1, count_include_pad=False."""
    Ho = (H - 1) // 2 + 1
    Wo = (W - 1) // 2 + 1
    oh = jnp.arange(Ho, dtype=jnp.float32)
    ow = jnp.arange(Wo, dtype=jnp.float32)
    vh = 3.0 - (oh == 0).astype(jnp.float32) - (2 * oh + 1 > H - 1).astype(jnp.float32)
    vw = 3.0 - (ow == 0).astype(jnp.float32) - (2 * ow + 1 > W - 1).astype(jnp.float32)
    cnt = vh[:, None] * vw[None, :]
    return (1.0 / cnt)[:, :, None]                        # (Ho, Wo, 1)


def avgpool_3x3_s2(x_nhwc):
    # TODO(synk): lane-dense (rows, W*C) slab layout for very large images.
    N, H, W, C = x_nhwc.shape
    Ho = (H - 1) // 2 + 1
    Wo = (W - 1) // 2 + 1
    Hp2, Wp2 = 2 * (Ho + 1), 2 * (Wo + 1)
    xp = jnp.pad(x_nhwc, ((0, 0), (1, Hp2 - H - 1), (1, Wp2 - W - 1), (0, 0)))
    planes = jnp.stack(
        [xp[:, 0::2, 0::2, :], xp[:, 0::2, 1::2, :],
         xp[:, 1::2, 0::2, :], xp[:, 1::2, 1::2, :]],
        axis=1,
    )                                                     # (N, 4, Ho+1, Wo+1, C)
    inv = _avgpool_inv_counts(H, W)
    return pl.pallas_call(
        functools.partial(_avgpool_kernel, Ho=Ho, Wo=Wo),
        out_shape=jax.ShapeDtypeStruct((N, Ho, Wo, C), x_nhwc.dtype),
        grid=(N,),
        in_specs=[
            pl.BlockSpec((1, 4, Ho + 1, Wo + 1, C), lambda n: (n, 0, 0, 0, 0)),
            pl.BlockSpec((Ho, Wo, 1), lambda n: (0, 0, 0)),
        ],
        out_specs=pl.BlockSpec((1, Ho, Wo, C), lambda n: (n, 0, 0, 0)),
        compiler_params=pltpu.CompilerParams(
            dimension_semantics=("parallel",),
            vmem_limit_bytes=_vmem_limit(),
        ),
    )(planes, inv)


# ----------------------------------------------------------------------------
# JAX glue: im2col patch extraction (pure data movement, bf16).
# ----------------------------------------------------------------------------
def _im2col(x_nhwc, k, s, pad):
    """(N, H, W, C) -> ((N*Ho*Wo, k*k*C), Ho, Wo)."""
    N, H, W, C = x_nhwc.shape
    xp = jnp.pad(x_nhwc, ((0, 0), (pad, pad), (pad, pad), (0, 0)))
    Hp, Wp = H + 2 * pad, W + 2 * pad
    Ho = (Hp - k) // s + 1
    Wo = (Wp - k) // s + 1
    taps = []
    for kh in range(k):
        for kw in range(k):
            taps.append(
                jax.lax.slice(
                    xp,
                    (0, kh, kw, 0),
                    (N, kh + (Ho - 1) * s + 1, kw + (Wo - 1) * s + 1, C),
                    (1, s, s, 1),
                )
            )
    pat = jnp.stack(taps, axis=3)                         # (N, Ho, Wo, k*k, C)
    return pat.reshape(N * Ho * Wo, k * k * C), Ho, Wo


def _fused_norm_fits(rows, kpad, npad):
    tn = 256 if npad % 256 == 0 else 128
    kb = min(kpad, _K_COLLAPSE)
    need = (2 * rows * kb + 2 * kb * tn + 2 * rows * tn) * 2 + 2 * rows * tn * 4
    return need <= _vmem_limit() // 2


def conv2d(x_nhwc, layer, *, out_dtype, fuse_norm=True):
    """Conv(k=4, pad=1) [+LeakyReLU | +InstanceNorm+LeakyReLU fused epilogue].

    Returns ((N, Ho, Wo, cout) out_dtype, norm_already_applied)."""
    N, H, W, Cin = x_nhwc.shape
    cin_pad, cout = layer["cin_pad"], layer["cout"]
    x = x_nhwc.astype(jnp.bfloat16)
    if cin_pad > Cin:
        x = jnp.pad(x, ((0, 0), (0, 0), (0, 0), (0, cin_pad - Cin)))
    xcol, Ho, Wo = _im2col(x, layer["k"], layer["stride"], 1)   # (M, 16*cin_pad)
    rows = Ho * Wo
    M = N * rows
    Kpad = xcol.shape[1]
    Npad = layer["w"].shape[1]

    fused = (
        fuse_norm
        and layer["norm"]
        and layer["act"]
        and rows % 8 == 0
        and _fused_norm_fits(rows, Kpad, Npad)
    )
    if fused:
        mode, tm = "in_lrelu", rows           # one whole sample per row tile
    else:
        mode = "lrelu" if (layer["act"] and not layer["norm"]) else "none"
        tm = min(_preferred_tm(), _round_up(M, 32))
        Mpad = _round_up(M, tm)
        if Mpad > M:
            xcol = jnp.pad(xcol, ((0, Mpad - M), (0, 0)))

    y = conv_gemm(xcol, layer["w"], layer["b"], mode=mode,
                  out_dtype=out_dtype, tm=tm)
    y = y[:M, :cout].reshape(N, Ho, Wo, cout)
    return y, fused


# ----------------------------------------------------------------------------
# Parameter construction (deterministic, synthetic) and forward passes.
# Weights reshaped to im2col layout and lane/sublane-padded ONCE at init.
# ----------------------------------------------------------------------------
def _conv_init(key, k, cin, cout):
    kw_, kb_ = jax.random.split(key)
    cin_pad = _round_up(cin, 8)         # -> K = k*k*cin_pad multiple of 128
    npad = _round_up(cout, 128)         # lane-dense unmasked output stores
    w = 0.02 * jax.random.normal(kw_, (k, k, cin, cout), jnp.float32)   # HWIO
    b = 0.02 * jax.random.normal(kb_, (1, cout), jnp.float32)
    w_pad = jnp.pad(w, ((0, 0), (0, 0), (0, cin_pad - cin), (0, npad - cout)))
    w_col = w_pad.reshape(k * k * cin_pad, npad).astype(jnp.bfloat16)
    b_pad = jnp.pad(b, ((0, 0), (0, npad - cout)))        # f32, zero lanes
    return w_col, b_pad, cin_pad


def init_patch_discriminator(key, in_channels, nf, n_layers):
    keys = jax.random.split(key, n_layers + 1)
    layers = []
    w, b, cpad = _conv_init(keys[0], 4, in_channels, nf)
    layers.append(dict(w=w, b=b, cin_pad=cpad, cout=nf, k=4, stride=2,
                       norm=False, act=True))
    nf_mult = 1
    for n in range(1, n_layers):
        nf_mult_prev = nf_mult
        nf_mult = min(2 ** n, 8)
        w, b, cpad = _conv_init(keys[n], 4, nf * nf_mult_prev, nf * nf_mult)
        layers.append(dict(w=w, b=b, cin_pad=cpad, cout=nf * nf_mult, k=4,
                           stride=2, norm=True, act=True))
    w, b, cpad = _conv_init(keys[n_layers], 4, nf * nf_mult, 1)
    layers.append(dict(w=w, b=b, cin_pad=cpad, cout=1, k=4, stride=1,
                       norm=False, act=False))
    return layers


def patch_discriminator_forward(layers, x_nhwc, *, fuse_norm=True):
    x = x_nhwc
    last = len(layers) - 1
    for idx, L in enumerate(layers):
        out_dtype = jnp.float32 if idx == last else jnp.bfloat16
        x, norm_done = conv2d(x, L, out_dtype=out_dtype, fuse_norm=fuse_norm)
        if L["norm"] and not norm_done:
            x = instnorm_lrelu(x)     # MONAI ADN order "NDA": norm then act
    return x


def multiscale_discriminator_forward(params_per_scale, x_nchw, *, fuse_norm=True):
    """Matches multiscale_discriminator.forward: one output per scale."""
    x = jnp.transpose(x_nchw, (0, 2, 3, 1))               # NCHW -> NHWC
    n_D = len(params_per_scale)
    results = []
    for i, p in enumerate(params_per_scale):
        y = patch_discriminator_forward(p, x, fuse_norm=fuse_norm)
        results.append(jnp.transpose(y, (0, 3, 1, 2)))    # back to NCHW
        if i != n_D - 1:
            x = avgpool_3x3_s2(x)
    return results


if __name__ == "__main__":
    key = jax.random.PRNGKey(0)
    k_x, k_p = jax.random.split(key)

    # small config: spatial_dims=2, in_channels=4, nf=8, n_layers=2,
    # norm_layer=instance, num_discriminator=2, return_features=False
    x = jax.random.normal(k_x, (2, 4, 16, 16), jnp.float32)   # NCHW, like PyTorch

    n_D = 2
    pkeys = jax.random.split(k_p, n_D)
    params = [
        init_patch_discriminator(pkeys[i], in_channels=4, nf=8, n_layers=2)
        for i in range(n_D)
    ]

    fwd = jax.jit(functools.partial(multiscale_discriminator_forward, params))
    outs = fwd(x)
    for o in outs:
        jax.block_until_ready(o)

    # expected shapes: [(2, 1, 3, 3), (2, 1, 1, 1)]
    assert outs[0].shape == (2, 1, 3, 3) and outs[1].shape == (2, 1, 1, 1)
    assert outs[0].dtype == jnp.float32

    # Cross-check fused conv+InstanceNorm epilogue against the standalone-norm
    # fallback kernels (difference = bf16 storage of the conv-2 activation).
    fwd_ref = jax.jit(
        functools.partial(multiscale_discriminator_forward, params,
                          fuse_norm=False)
    )
    outs_ref = fwd_ref(x)
    for a, b in zip(outs, outs_ref):
        jax.block_until_ready(b)
        diff = float(jnp.max(jnp.abs(a - b)))
        assert diff < 0.15, f"fused vs unfused InstanceNorm mismatch: {diff}"

    print("KERNEL_OK")
</pallas_src>

<mosaic_0001>
module attributes {stable_mosaic.version = 11 : i64} {
  func.func @_avgpool_kernel(%arg0: i32, %arg1: memref<1x4x9x9x4xf32, #tpu.memory_space<vmem>>, %arg2: memref<8x8x1xf32, #tpu.memory_space<vmem>>, %arg3: memref<1x8x8x4xf32, #tpu.memory_space<vmem>>) attributes {dimension_semantics = [#tpu.dimension_semantics<parallel>], iteration_bounds = array<i64: 2>, scalar_prefetch = 0 : i64, scratch_operands = 0 : i64, tpu.core_type = #tpu.core_type<tc>, window_params = [{transform_indices = @transform_0, window_bounds = array<i64: 1, 4, 9, 9, 4>}, {pipeline_mode = #tpu.pipeline_mode<synchronous>, transform_indices = @transform_1, window_bounds = array<i64: 8, 8, 1>}, {transform_indices = @transform_2, window_bounds = array<i64: 1, 8, 8, 4>}]} {
    %c0 = arith.constant 0 : index
    %c3 = arith.constant 3 : index
    %c0_0 = arith.constant 0 : index
    %c0_1 = arith.constant 0 : index
    %c0_2 = arith.constant 0 : index
    %0 = vector.load %arg1[%c0, %c3, %c0_0, %c0_1, %c0_2] : memref<1x4x9x9x4xf32, #tpu.memory_space<vmem>>, vector<1x1x8x8x4xf32>
    %1 = vector.shape_cast %0 : vector<1x1x8x8x4xf32> to vector<8x8x4xf32>
    %c0_3 = arith.constant 0 : index
    %c0_4 = arith.constant 0 : index
    %c0_5 = arith.constant 0 : index
    %c0_6 = arith.constant 0 : index
    %c0_7 = arith.constant 0 : index
    %2 = vector.load %arg1[%c0_3, %c0_4, %c0_5, %c0_6, %c0_7] : memref<1x4x9x9x4xf32, #tpu.memory_space<vmem>>, vector<1x1x8x8x4xf32>
    %3 = vector.shape_cast %2 : vector<1x1x8x8x4xf32> to vector<8x8x4xf32>
    %c0_8 = arith.constant 0 : index
    %c0_9 = arith.constant 0 : index
    %c0_10 = arith.constant 0 : index
    %c1 = arith.constant 1 : index
    %c0_11 = arith.constant 0 : index
    %4 = vector.load %arg1[%c0_8, %c0_9, %c0_10, %c1, %c0_11] : memref<1x4x9x9x4xf32, #tpu.memory_space<vmem>>, vector<1x1x8x8x4xf32>
    %5 = vector.shape_cast %4 : vector<1x1x8x8x4xf32> to vector<8x8x4xf32>
    %6 = arith.addf %3, %5 : vector<8x8x4xf32>
    %c0_12 = arith.constant 0 : index
    %c0_13 = arith.constant 0 : index
    %c1_14 = arith.constant 1 : index
    %c0_15 = arith.constant 0 : index
    %c0_16 = arith.constant 0 : index
    %7 = vector.load %arg1[%c0_12, %c0_13, %c1_14, %c0_15, %c0_16] : memref<1x4x9x9x4xf32, #tpu.memory_space<vmem>>, vector<1x1x8x8x4xf32>
    %8 = vector.shape_cast %7 : vector<1x1x8x8x4xf32> to vector<8x8x4xf32>
    %9 = arith.addf %6, %8 : vector<8x8x4xf32>
    %c0_17 = arith.constant 0 : index
    %c0_18 = arith.constant 0 : index
    %c1_19 = arith.constant 1 : index
    %c1_20 = arith.constant 1 : index
    %c0_21 = arith.constant 0 : index
    %10 = vector.load %arg1[%c0_17, %c0_18, %c1_19, %c1_20, %c0_21] : memref<1x4x9x9x4xf32, #tpu.memory_space<vmem>>, vector<1x1x8x8x4xf32>
    %11 = vector.shape_cast %10 : vector<1x1x8x8x4xf32> to vector<8x8x4xf32>
    %12 = arith.addf %9, %11 : vector<8x8x4xf32>
    %c0_22 = arith.constant 0 : index
    %c1_23 = arith.constant 1 : index
    %c0_24 = arith.constant 0 : index
    %c0_25 = arith.constant 0 : index
    %c0_26 = arith.constant 0 : index
    %13 = vector.load %arg1[%c0_22, %c1_23, %c0_24, %c0_25, %c0_26] : memref<1x4x9x9x4xf32, #tpu.memory_space<vmem>>, vector<1x1x8x8x4xf32>
    %14 = vector.shape_cast %13 : vector<1x1x8x8x4xf32> to vector<8x8x4xf32>
    %15 = arith.addf %12, %14 : vector<8x8x4xf32>
    %c0_27 = arith.constant 0 : index
    %c1_28 = arith.constant 1 : index
    %c1_29 = arith.constant 1 : index
    %c0_30 = arith.constant 0 : index
    %c0_31 = arith.constant 0 : index
    %16 = vector.load %arg1[%c0_27, %c1_28, %c1_29, %c0_30, %c0_31] : memref<1x4x9x9x4xf32, #tpu.memory_space<vmem>>, vector<1x1x8x8x4xf32>
    %17 = vector.shape_cast %16 : vector<1x1x8x8x4xf32> to vector<8x8x4xf32>
    %18 = arith.addf %15, %17 : vector<8x8x4xf32>
    %c0_32 = arith.constant 0 : index
    %c2 = arith.constant 2 : index
    %c0_33 = arith.constant 0 : index
    %c0_34 = arith.constant 0 : index
    %c0_35 = arith.constant 0 : index
    %19 = vector.load %arg1[%c0_32, %c2, %c0_33, %c0_34, %c0_35] : memref<1x4x9x9x4xf32, #tpu.memory_space<vmem>>, vector<1x1x8x8x4xf32>
    %20 = vector.shape_cast %19 : vector<1x1x8x8x4xf32> to vector<8x8x4xf32>
    %21 = arith.addf %18, %20 : vector<8x8x4xf32>
    %c0_36 = arith.constant 0 : index
    %c2_37 = arith.constant 2 : index
    %c0_38 = arith.constant 0 : index
    %c1_39 = arith.constant 1 : index
    %c0_40 = arith.constant 0 : index
    %22 = vector.load %arg1[%c0_36, %c2_37, %c0_38, %c1_39, %c0_40] : memref<1x4x9x9x4xf32, #tpu.memory_space<vmem>>, vector<1x1x8x8x4xf32>
    %23 = vector.shape_cast %22 : vector<1x1x8x8x4xf32> to vector<8x8x4xf32>
    %24 = arith.addf %21, %23 : vector<8x8x4xf32>
    %25 = arith.addf %24, %1 : vector<8x8x4xf32>
    %c0_41 = arith.constant 0 : index
    %c0_42 = arith.constant 0 : index
    %c0_43 = arith.constant 0 : index
    %26 = vector.load %arg2[%c0_41, %c0_42, %c0_43] : memref<8x8x1xf32, #tpu.memory_space<vmem>>, vector<8x8x1xf32>
    %27 = vector.broadcast %26 : vector<8x8x1xf32> to vector<8x8x4xf32>
    %28 = arith.mulf %25, %27 : vector<8x8x4xf32>
    %c0_44 = arith.constant 0 : index
    %c0_45 = arith.constant 0 : index
    %c0_46 = arith.constant 0 : index
    %c0_47 = arith.constant 0 : index
    %29 = vector.load %arg3[%c0_44, %c0_45, %c0_46, %c0_47] : memref<1x8x8x4xf32, #tpu.memory_space<vmem>>, vector<1x8x8x4xf32>
    %30 = vector.shape_cast %29 : vector<1x8x8x4xf32> to vector<8x8x4xf32>
    %31 = vector.shape_cast %28 : vector<8x8x4xf32> to vector<1x8x8x4xf32>
    tpu.vector_store %arg3[%c0_44, %c0_45, %c0_46, %c0_47], %31 {strides = array<i32>} : memref<1x8x8x4xf32, #tpu.memory_space<vmem>>, vector<1x8x8x4xf32>,
    return
  }
  func.func @transform_0(%arg0: i32) -> (i32, i32, i32, i32, i32) {
    %c0_i32 = arith.constant 0 : i32
    %c0_i32_0 = arith.constant 0 : i32
    %c0_i32_1 = arith.constant 0 : i32
    %c0_i32_2 = arith.constant 0 : i32
    %c0_i32_3 = arith.constant 0 : i32
    return %arg0, %c0_i32, %c0_i32_0, %c0_i32_1, %c0_i32_2 : i32, i32, i32, i32, i32
  }
  func.func @transform_1(%arg0: i32) -> (i32, i32, i32) {
    %c0_i32 = arith.constant 0 : i32
    %c0_i32_0 = arith.constant 0 : i32
    %c0_i32_1 = arith.constant 0 : i32
    %c0_i32_2 = arith.constant 0 : i32
    return %c0_i32, %c0_i32_0, %c0_i32_1 : i32, i32, i32
  }
  func.func @transform_2(%arg0: i32) -> (i32, i32, i32, i32) {
    %c0_i32 = arith.constant 0 : i32
    %c0_i32_0 = arith.constant 0 : i32
    %c0_i32_1 = arith.constant 0 : i32
    %c0_i32_2 = arith.constant 0 : i32
    return %arg0, %c0_i32, %c0_i32_0, %c0_i32_1 : i32, i32, i32, i32
  }
}

module attributes {stable_mosaic.version = 11 : i64} {
  func.func @_gemm_kernel(%arg0: i32, %arg1: i32, %arg2: memref<32x128xbf16, #tpu.memory_space<vmem>>, %arg3: memref<128x128xbf16, #tpu.memory_space<vmem>>, %arg4: memref<1x128xf32, #tpu.memory_space<vmem>>, %arg5: memref<32x128xbf16, #tpu.memory_space<vmem>>) attributes {dimension_semantics = [#tpu.dimension_semantics<parallel>, #tpu.dimension_semantics<parallel>], iteration_bounds = array<i64: 1, 1>, scalar_prefetch = 0 : i64, scratch_operands = 0 : i64, tpu.core_type = #tpu.core_type<tc>, window_params = [{transform_indices = @transform_0, window_bounds = array<i64: 32, 128>}, {transform_indices = @transform_1, window_bounds = array<i64: 128, 128>}, {transform_indices = @transform_2, window_bounds = array<i64: 1, 128>}, {transform_indices = @transform_3, window_bounds = array<i64: 32, 128>}]} {
    %c0 = arith.constant 0 : index
    %c0_0 = arith.constant 0 : index
    %0 = vector.load %arg2[%c0, %c0_0] : memref<32x128xbf16, #tpu.memory_space<vmem>>, vector<32x128xbf16>
    %c0_1 = arith.constant 0 : index
    %c0_2 = arith.constant 0 : index
    %1 = vector.load %arg3[%c0_1, %c0_2] : memref<128x128xbf16, #tpu.memory_space<vmem>>, vector<128x128xbf16>
    %cst = arith.constant dense<0.000000e+00> : vector<32x128xf32>
    %2 = tpu.matmul %0, %1, %cst {dimension_numbers = #tpu.dot_dimension_numbers<[1], [0], [0], [1], [0, 0, 1, 1], [], []>} : vector<32x128xbf16>, vector<128x128xbf16>, vector<32x128xf32> -> vector<32x128xf32>
    %c0_3 = arith.constant 0 : index
    %c0_4 = arith.constant 0 : index
    %3 = vector.load %arg4[%c0_3, %c0_4] : memref<1x128xf32, #tpu.memory_space<vmem>>, vector<1x128xf32>
    %4 = vector.broadcast %3 : vector<1x128xf32> to vector<32x128xf32>
    %5 = arith.addf %2, %4 : vector<32x128xf32>
    %cst_5 = arith.constant 0.000000e+00 : f32
    %6 = vector.broadcast %cst_5 : f32 to vector<32x128xf32>
    %7 = arith.cmpf ogt, %5, %6 : vector<32x128xf32>
    %cst_6 = arith.constant 2.000000e-01 : f32
    %8 = vector.broadcast %cst_6 : f32 to vector<32x128xf32>
    %9 = arith.mulf %8, %5 : vector<32x128xf32>
    %10 = arith.select %7, %5, %9 : vector<32x128xi1>, vector<32x128xf32>
    %11 = arith.truncf %10 : vector<32x128xf32> to vector<32x128xbf16>
    %c0_7 = arith.constant 0 : index
    %c0_8 = arith.constant 0 : index
    %12 = vector.load %arg5[%c0_7, %c0_8] : memref<32x128xbf16, #tpu.memory_space<vmem>>, vector<32x128xbf16>
    tpu.vector_store %arg5[%c0_7, %c0_8], %11 {strides = array<i32>} : memref<32x128xbf16, #tpu.memory_space<vmem>>, vector<32x128xbf16>,
    return
  }
  func.func @transform_0(%arg0: i32, %arg1: i32) -> (i32, i32) {
    %c0_i32 = arith.constant 0 : i32
    %c0_i32_0 = arith.constant 0 : i32
    return %arg1, %c0_i32 : i32, i32
  }
  func.func @transform_1(%arg0: i32, %arg1: i32) -> (i32, i32) {
    %c0_i32 = arith.constant 0 : i32
    %c0_i32_0 = arith.constant 0 : i32
    return %c0_i32, %arg0 : i32, i32
  }
  func.func @transform_2(%arg0: i32, %arg1: i32) -> (i32, i32) {
    %c0_i32 = arith.constant 0 : i32
    %c0_i32_0 = arith.constant 0 : i32
    return %c0_i32, %arg0 : i32, i32
  }
  func.func @transform_3(%arg0: i32, %arg1: i32) -> (i32, i32) {
    %c0_i32 = arith.constant 0 : i32
    return %arg1, %arg0 : i32, i32
  }
}

module attributes {stable_mosaic.version = 11 : i64} {
  func.func @_gemm_kernel(%arg0: i32, %arg1: i32, %arg2: memref<32x128xbf16, #tpu.memory_space<vmem>>, %arg3: memref<128x128xbf16, #tpu.memory_space<vmem>>, %arg4: memref<1x128xf32, #tpu.memory_space<vmem>>, %arg5: memref<32x128xbf16, #tpu.memory_space<vmem>>) attributes {dimension_semantics = [#tpu.dimension_semantics<parallel>, #tpu.dimension_semantics<parallel>], iteration_bounds = array<i64: 1, 1>, scalar_prefetch = 0 : i64, scratch_operands = 0 : i64, tpu.core_type = #tpu.core_type<tc>, window_params = [{transform_indices = @transform_0, window_bounds = array<i64: 32, 128>}, {transform_indices = @transform_1, window_bounds = array<i64: 128, 128>}, {transform_indices = @transform_2, window_bounds = array<i64: 1, 128>}, {transform_indices = @transform_3, window_bounds = array<i64: 32, 128>}]} {
    %c0 = arith.constant 0 : index
    %c0_0 = arith.constant 0 : index
    %0 = vector.load %arg2[%c0, %c0_0] : memref<32x128xbf16, #tpu.memory_space<vmem>>, vector<32x128xbf16>
    %c0_1 = arith.constant 0 : index
    %c0_2 = arith.constant 0 : index
    %1 = vector.load %arg3[%c0_1, %c0_2] : memref<128x128xbf16, #tpu.memory_space<vmem>>, vector<128x128xbf16>
    %cst = arith.constant dense<0.000000e+00> : vector<32x128xf32>
    %2 = tpu.matmul %0, %1, %cst {dimension_numbers = #tpu.dot_dimension_numbers<[1], [0], [0], [1], [0, 0, 1, 1], [], []>} : vector<32x128xbf16>, vector<128x128xbf16>, vector<32x128xf32> -> vector<32x128xf32>
    %c0_3 = arith.constant 0 : index
    %c0_4 = arith.constant 0 : index
    %3 = vector.load %arg4[%c0_3, %c0_4] : memref<1x128xf32, #tpu.memory_space<vmem>>, vector<1x128xf32>
    %4 = vector.broadcast %3 : vector<1x128xf32> to vector<32x128xf32>
    %5 = arith.addf %2, %4 : vector<32x128xf32>
    %6 = arith.truncf %5 : vector<32x128xf32> to vector<32x128xbf16>
    %c0_5 = arith.constant 0 : index
    %c0_6 = arith.constant 0 : index
    %7 = vector.load %arg5[%c0_5, %c0_6] : memref<32x128xbf16, #tpu.memory_space<vmem>>, vector<32x128xbf16>
    tpu.vector_store %arg5[%c0_5, %c0_6], %6 {strides = array<i32>} : memref<32x128xbf16, #tpu.memory_space<vmem>>, vector<32x128xbf16>,
    return
  }
  func.func @transform_0(%arg0: i32, %arg1: i32) -> (i32, i32) {
    %c0_i32 = arith.constant 0 : i32
    %c0_i32_0 = arith.constant 0 : i32
    return %arg1, %c0_i32 : i32, i32
  }
  func.func @transform_1(%arg0: i32, %arg1: i32) -> (i32, i32) {
    %c0_i32 = arith.constant 0 : i32
    %c0_i32_0 = arith.constant 0 : i32
    return %c0_i32, %arg0 : i32, i32
  }
  func.func @transform_2(%arg0: i32, %arg1: i32) -> (i32, i32) {
    %c0_i32 = arith.constant 0 : i32
    %c0_i32_0 = arith.constant 0 : i32
    return %c0_i32, %arg0 : i32, i32
  }
  func.func @transform_3(%arg0: i32, %arg1: i32) -> (i32, i32) {
    %c0_i32 = arith.constant 0 : i32
    return %arg1, %arg0 : i32, i32
  }
}

module attributes {stable_mosaic.version = 11 : i64} {
  func.func @_instnorm_lrelu_kernel(%arg0: i32, %arg1: memref<1x4x16xbf16, #tpu.memory_space<vmem>>, %arg2: memref<1x4x16xbf16, #tpu.memory_space<vmem>>) attributes {dimension_semantics = [#tpu.dimension_semantics<parallel>], iteration_bounds = array<i64: 2>, scalar_prefetch = 0 : i64, scratch_operands = 0 : i64, tpu.core_type = #tpu.core_type<tc>, window_params = [{transform_indices = @transform_0, window_bounds = array<i64: 1, 4, 16>}, {transform_indices = @transform_1, window_bounds = array<i64: 1, 4, 16>}]} {
    %c0 = arith.constant 0 : index
    %c0_0 = arith.constant 0 : index
    %c0_1 = arith.constant 0 : index
    %0 = vector.load %arg1[%c0, %c0_0, %c0_1] : memref<1x4x16xbf16, #tpu.memory_space<vmem>>, vector<1x4x16xbf16>
    %1 = arith.extf %0 : vector<1x4x16xbf16> to vector<1x4x16xf32>
    %cst = arith.constant dense<0.000000e+00> : vector<1x16xf32>
    %2 = vector.multi_reduction <add>, %1, %cst [1] : vector<1x4x16xf32> to vector<1x16xf32>
    %3 = vector.shape_cast %2 : vector<1x16xf32> to vector<1x1x16xf32>
    %cst_2 = arith.constant 4.000000e+00 : f32
    %4 = vector.broadcast %cst_2 : f32 to vector<1x1x16xf32>
    %5 = arith.divf %3, %4 : vector<1x1x16xf32>
    %6 = vector.broadcast %5 : vector<1x1x16xf32> to vector<1x4x16xf32>
    %7 = arith.subf %1, %6 : vector<1x4x16xf32>
    %8 = arith.mulf %7, %7 : vector<1x4x16xf32>
    %cst_3 = arith.constant dense<0.000000e+00> : vector<1x16xf32>
    %9 = vector.multi_reduction <add>, %8, %cst_3 [1] : vector<1x4x16xf32> to vector<1x16xf32>
    %10 = vector.shape_cast %9 : vector<1x16xf32> to vector<1x1x16xf32>
    %cst_4 = arith.constant 4.000000e+00 : f32
    %11 = vector.broadcast %cst_4 : f32 to vector<1x1x16xf32>
    %12 = arith.divf %10, %11 : vector<1x1x16xf32>
    %cst_5 = arith.constant 9.99999974E-6 : f32
    %13 = vector.broadcast %cst_5 : f32 to vector<1x1x16xf32>
    %14 = arith.addf %12, %13 : vector<1x1x16xf32>
    %15 = math.rsqrt %14 : vector<1x1x16xf32>
    %16 = vector.broadcast %15 : vector<1x1x16xf32> to vector<1x4x16xf32>
    %17 = arith.mulf %7, %16 : vector<1x4x16xf32>
    %cst_6 = arith.constant 0.000000e+00 : f32
    %18 = vector.broadcast %cst_6 : f32 to vector<1x4x16xf32>
    %19 = arith.cmpf ogt, %17, %18 : vector<1x4x16xf32>
    %cst_7 = arith.constant 2.000000e-01 : f32
    %20 = vector.broadcast %cst_7 : f32 to vector<1x4x16xf32>
    %21 = arith.mulf %20, %17 : vector<1x4x16xf32>
    %22 = arith.select %19, %17, %21 : vector<1x4x16xi1>, vector<1x4x16xf32>
    %23 = arith.truncf %22 : vector<1x4x16xf32> to vector<1x4x16xbf16>
    %c0_8 = arith.constant 0 : index
    %c0_9 = arith.constant 0 : index
    %c0_10 = arith.constant 0 : index
    %24 = vector.load %arg2[%c0_8, %c0_9, %c0_10] : memref<1x4x16xbf16, #tpu.memory_space<vmem>>, vector<1x4x16xbf16>
    tpu.vector_store %arg2[%c0_8, %c0_9, %c0_10], %23 {strides = array<i32>} : memref<1x4x16xbf16, #tpu.memory_space<vmem>>, vector<1x4x16xbf16>,
    return
  }
  func.func @transform_0(%arg0: i32) -> (i32, i32, i32) {
    %c0_i32 = arith.constant 0 : i32
    %c0_i32_0 = arith.constant 0 : i32
    %c0_i32_1 = arith.constant 0 : i32
    return %arg0, %c0_i32, %c0_i32_0 : i32, i32, i32
  }
  func.func @transform_1(%arg0: i32) -> (i32, i32, i32) {
    %c0_i32 = arith.constant 0 : i32
    %c0_i32_0 = arith.constant 0 : i32
    %c0_i32_1 = arith.constant 0 : i32
    return %arg0, %c0_i32, %c0_i32_0 : i32, i32, i32
  }
}

module attributes {stable_mosaic.version = 11 : i64} {
  func.func @_gemm_kernel(%arg0: i32, %arg1: i32, %arg2: memref<32x256xbf16, #tpu.memory_space<vmem>>, %arg3: memref<256x128xbf16, #tpu.memory_space<vmem>>, %arg4: memref<1x128xf32, #tpu.memory_space<vmem>>, %arg5: memref<32x128xf32, #tpu.memory_space<vmem>>) attributes {dimension_semantics = [#tpu.dimension_semantics<parallel>, #tpu.dimension_semantics<parallel>], iteration_bounds = array<i64: 1, 1>, scalar_prefetch = 0 : i64, scratch_operands = 0 : i64, tpu.core_type = #tpu.core_type<tc>, window_params = [{transform_indices = @transform_0, window_bounds = array<i64: 32, 256>}, {transform_indices = @transform_1, window_bounds = array<i64: 256, 128>}, {transform_indices = @transform_2, window_bounds = array<i64: 1, 128>}, {transform_indices = @transform_3, window_bounds = array<i64: 32, 128>}]} {
    %c0 = arith.constant 0 : index
    %c0_0 = arith.constant 0 : index
    %0 = vector.load %arg2[%c0, %c0_0] : memref<32x256xbf16, #tpu.memory_space<vmem>>, vector<32x256xbf16>
    %c0_1 = arith.constant 0 : index
    %c0_2 = arith.constant 0 : index
    %1 = vector.load %arg3[%c0_1, %c0_2] : memref<256x128xbf16, #tpu.memory_space<vmem>>, vector<256x128xbf16>
    %cst = arith.constant dense<0.000000e+00> : vector<32x128xf32>
    %2 = tpu.matmul %0, %1, %cst {dimension_numbers = #tpu.dot_dimension_numbers<[1], [0], [0], [1], [0, 0, 1, 1], [], []>} : vector<32x256xbf16>, vector<256x128xbf16>, vector<32x128xf32> -> vector<32x128xf32>
    %c0_3 = arith.constant 0 : index
    %c0_4 = arith.constant 0 : index
    %3 = vector.load %arg4[%c0_3, %c0_4] : memref<1x128xf32, #tpu.memory_space<vmem>>, vector<1x128xf32>
    %4 = vector.broadcast %3 : vector<1x128xf32> to vector<32x128xf32>
    %5 = arith.addf %2, %4 : vector<32x128xf32>
    %c0_5 = arith.constant 0 : index
    %c0_6 = arith.constant 0 : index
    %6 = vector.load %arg5[%c0_5, %c0_6] : memref<32x128xf32, #tpu.memory_space<vmem>>, vector<32x128xf32>
    tpu.vector_store %arg5[%c0_5, %c0_6], %5 {strides = array<i32>} : memref<32x128xf32, #tpu.memory_space<vmem>>, vector<32x128xf32>,
    return
  }
  func.func @transform_0(%arg0: i32, %arg1: i32) -> (i32, i32) {
    %c0_i32 = arith.constant 0 : i32
    %c0_i32_0 = arith.constant 0 : i32
    return %arg1, %c0_i32 : i32, i32
  }
  func.func @transform_1(%arg0: i32, %arg1: i32) -> (i32, i32) {
    %c0_i32 = arith.constant 0 : i32
    %c0_i32_0 = arith.constant 0 : i32
    return %c0_i32, %arg0 : i32, i32
  }
  func.func @transform_2(%arg0: i32, %arg1: i32) -> (i32, i32) {
    %c0_i32 = arith.constant 0 : i32
    %c0_i32_0 = arith.constant 0 : i32
    return %c0_i32, %arg0 : i32, i32
  }
  func.func @transform_3(%arg0: i32, %arg1: i32) -> (i32, i32) {
    %c0_i32 = arith.constant 0 : i32
    return %arg1, %arg0 : i32, i32
  }
}

module attributes {stable_mosaic.version = 11 : i64} {
  func.func @_gemm_kernel(%arg0: i32, %arg1: i32, %arg2: memref<128x128xbf16, #tpu.memory_space<vmem>>, %arg3: memref<128x128xbf16, #tpu.memory_space<vmem>>, %arg4: memref<1x128xf32, #tpu.memory_space<vmem>>, %arg5: memref<128x128xbf16, #tpu.memory_space<vmem>>) attributes {dimension_semantics = [#tpu.dimension_semantics<parallel>, #tpu.dimension_semantics<parallel>], iteration_bounds = array<i64: 1, 1>, scalar_prefetch = 0 : i64, scratch_operands = 0 : i64, tpu.core_type = #tpu.core_type<tc>, window_params = [{transform_indices = @transform_0, window_bounds = array<i64: 128, 128>}, {transform_indices = @transform_1, window_bounds = array<i64: 128, 128>}, {transform_indices = @transform_2, window_bounds = array<i64: 1, 128>}, {transform_indices = @transform_3, window_bounds = array<i64: 128, 128>}]} {
    %c0 = arith.constant 0 : index
    %c0_0 = arith.constant 0 : index
    %0 = vector.load %arg2[%c0, %c0_0] : memref<128x128xbf16, #tpu.memory_space<vmem>>, vector<128x128xbf16>
    %c0_1 = arith.constant 0 : index
    %c0_2 = arith.constant 0 : index
    %1 = vector.load %arg3[%c0_1, %c0_2] : memref<128x128xbf16, #tpu.memory_space<vmem>>, vector<128x128xbf16>
    %cst = arith.constant dense<0.000000e+00> : vector<128x128xf32>
    %2 = tpu.matmul %0, %1, %cst {dimension_numbers = #tpu.dot_dimension_numbers<[1], [0], [0], [1], [0, 0, 1, 1], [], []>} : vector<128x128xbf16>, vector<128x128xbf16>, vector<128x128xf32> -> vector<128x128xf32>
    %c0_3 = arith.constant 0 : index
    %c0_4 = arith.constant 0 : index
    %3 = vector.load %arg4[%c0_3, %c0_4] : memref<1x128xf32, #tpu.memory_space<vmem>>, vector<1x128xf32>
    %4 = vector.broadcast %3 : vector<1x128xf32> to vector<128x128xf32>
    %5 = arith.addf %2, %4 : vector<128x128xf32>
    %cst_5 = arith.constant 0.000000e+00 : f32
    %6 = vector.broadcast %cst_5 : f32 to vector<128x128xf32>
    %7 = arith.cmpf ogt, %5, %6 : vector<128x128xf32>
    %cst_6 = arith.constant 2.000000e-01 : f32
    %8 = vector.broadcast %cst_6 : f32 to vector<128x128xf32>
    %9 = arith.mulf %8, %5 : vector<128x128xf32>
    %10 = arith.select %7, %5, %9 : vector<128x128xi1>, vector<128x128xf32>
    %11 = arith.truncf %10 : vector<128x128xf32> to vector<128x128xbf16>
    %c0_7 = arith.constant 0 : index
    %c0_8 = arith.constant 0 : index
    %12 = vector.load %arg5[%c0_7, %c0_8] : memref<128x128xbf16, #tpu.memory_space<vmem>>, vector<128x128xbf16>
    tpu.vector_store %arg5[%c0_7, %c0_8], %11 {strides = array<i32>} : memref<128x128xbf16, #tpu.memory_space<vmem>>, vector<128x128xbf16>,
    return
  }
  func.func @transform_0(%arg0: i32, %arg1: i32) -> (i32, i32) {
    %c0_i32 = arith.constant 0 : i32
    %c0_i32_0 = arith.constant 0 : i32
    return %arg1, %c0_i32 : i32, i32
  }
  func.func @transform_1(%arg0: i32, %arg1: i32) -> (i32, i32) {
    %c0_i32 = arith.constant 0 : i32
    %c0_i32_0 = arith.constant 0 : i32
    return %c0_i32, %arg0 : i32, i32
  }
  func.func @transform_2(%arg0: i32, %arg1: i32) -> (i32, i32) {
    %c0_i32 = arith.constant 0 : i32
    %c0_i32_0 = arith.constant 0 : i32
    return %c0_i32, %arg0 : i32, i32
  }
  func.func @transform_3(%arg0: i32, %arg1: i32) -> (i32, i32) {
    %c0_i32 = arith.constant 0 : i32
    return %arg1, %arg0 : i32, i32
  }
}

module attributes {stable_mosaic.version = 11 : i64} {
  func.func @_gemm_kernel(%arg0: i32, %arg1: i32, %arg2: memref<16x128xbf16, #tpu.memory_space<vmem>>, %arg3: memref<128x128xbf16, #tpu.memory_space<vmem>>, %arg4: memref<1x128xf32, #tpu.memory_space<vmem>>, %arg5: memref<16x128xbf16, #tpu.memory_space<vmem>>) attributes {dimension_semantics = [#tpu.dimension_semantics<parallel>, #tpu.dimension_semantics<parallel>], iteration_bounds = array<i64: 1, 2>, scalar_prefetch = 0 : i64, scratch_operands = 0 : i64, tpu.core_type = #tpu.core_type<tc>, window_params = [{transform_indices = @transform_0, window_bounds = array<i64: 16, 128>}, {transform_indices = @transform_1, window_bounds = array<i64: 128, 128>}, {transform_indices = @transform_2, window_bounds = array<i64: 1, 128>}, {transform_indices = @transform_3, window_bounds = array<i64: 16, 128>}]} {
    %c0 = arith.constant 0 : index
    %c0_0 = arith.constant 0 : index
    %0 = vector.load %arg2[%c0, %c0_0] : memref<16x128xbf16, #tpu.memory_space<vmem>>, vector<16x128xbf16>
    %c0_1 = arith.constant 0 : index
    %c0_2 = arith.constant 0 : index
    %1 = vector.load %arg3[%c0_1, %c0_2] : memref<128x128xbf16, #tpu.memory_space<vmem>>, vector<128x128xbf16>
    %cst = arith.constant dense<0.000000e+00> : vector<16x128xf32>
    %2 = tpu.matmul %0, %1, %cst {dimension_numbers = #tpu.dot_dimension_numbers<[1], [0], [0], [1], [0, 0, 1, 1], [], []>} : vector<16x128xbf16>, vector<128x128xbf16>, vector<16x128xf32> -> vector<16x128xf32>
    %c0_3 = arith.constant 0 : index
    %c0_4 = arith.constant 0 : index
    %3 = vector.load %arg4[%c0_3, %c0_4] : memref<1x128xf32, #tpu.memory_space<vmem>>, vector<1x128xf32>
    %4 = vector.broadcast %3 : vector<1x128xf32> to vector<16x128xf32>
    %5 = arith.addf %2, %4 : vector<16x128xf32>
    %cst_5 = arith.constant dense<0.000000e+00> : vector<128xf32>
    %6 = vector.multi_reduction <add>, %5, %cst_5 [0] : vector<16x128xf32> to vector<128xf32>
    %7 = vector.shape_cast %6 : vector<128xf32> to vector<1x128xf32>
    %cst_6 = arith.constant 1.600000e+01 : f32
    %8 = vector.broadcast %cst_6 : f32 to vector<1x128xf32>
    %9 = arith.divf %7, %8 : vector<1x128xf32>
    %10 = vector.broadcast %9 : vector<1x128xf32> to vector<16x128xf32>
    %11 = arith.subf %5, %10 : vector<16x128xf32>
    %12 = arith.mulf %11, %11 : vector<16x128xf32>
    %cst_7 = arith.constant dense<0.000000e+00> : vector<128xf32>
    %13 = vector.multi_reduction <add>, %12, %cst_7 [0] : vector<16x128xf32> to vector<128xf32>
    %14 = vector.shape_cast %13 : vector<128xf32> to vector<1x128xf32>
    %cst_8 = arith.constant 1.600000e+01 : f32
    %15 = vector.broadcast %cst_8 : f32 to vector<1x128xf32>
    %16 = arith.divf %14, %15 : vector<1x128xf32>
    %cst_9 = arith.constant 9.99999974E-6 : f32
    %17 = vector.broadcast %cst_9 : f32 to vector<1x128xf32>
    %18 = arith.addf %16, %17 : vector<1x128xf32>
    %19 = math.rsqrt %18 : vector<1x128xf32>
    %20 = vector.broadcast %19 : vector<1x128xf32> to vector<16x128xf32>
    %21 = arith.mulf %11, %20 : vector<16x128xf32>
    %cst_10 = arith.constant 0.000000e+00 : f32
    %22 = vector.broadcast %cst_10 : f32 to vector<16x128xf32>
    %23 = arith.cmpf ogt, %21, %22 : vector<16x128xf32>
    %cst_11 = arith.constant 2.000000e-01 : f32
    %24 = vector.broadcast %cst_11 : f32 to vector<16x128xf32>
    %25 = arith.mulf %24, %21 : vector<16x128xf32>
    %26 = arith.select %23, %21, %25 : vector<16x128xi1>, vector<16x128xf32>
    %27 = arith.truncf %26 : vector<16x128xf32> to vector<16x128xbf16>
    %c0_12 = arith.constant 0 : index
    %c0_13 = arith.constant 0 : index
    %28 = vector.load %arg5[%c0_12, %c0_13] : memref<16x128xbf16, #tpu.memory_space<vmem>>, vector<16x128xbf16>
    tpu.vector_store %arg5[%c0_12, %c0_13], %27 {strides = array<i32>} : memref<16x128xbf16, #tpu.memory_space<vmem>>, vector<16x128xbf16>,
    return
  }
  func.func @transform_0(%arg0: i32, %arg1: i32) -> (i32, i32) {
    %c0_i32 = arith.constant 0 : i32
    %c0_i32_0 = arith.constant 0 : i32
    return %arg1, %c0_i32 : i32, i32
  }
  func.func @transform_1(%arg0: i32, %arg1: i32) -> (i32, i32) {
    %c0_i32 = arith.constant 0 : i32
    %c0_i32_0 = arith.constant 0 : i32
    return %c0_i32, %arg0 : i32, i32
  }
  func.func @transform_2(%arg0: i32, %arg1: i32) -> (i32, i32) {
    %c0_i32 = arith.constant 0 : i32
    %c0_i32_0 = arith.constant 0 : i32
    return %c0_i32, %arg0 : i32, i32
  }
  func.func @transform_3(%arg0: i32, %arg1: i32) -> (i32, i32) {
    %c0_i32 = arith.constant 0 : i32
    return %arg1, %arg0 : i32, i32
  }
}

</mosaic_0001>

<llo_original>
// kernel: multiscale_discriminator_forward.11
$region0: #{multiscale_discriminator_forward.11}
  #allocation0 [shape = 'u32[]', space=smem, size = 0x4, offset = 0x4, fixed_abs, tag = 'smem constant byte address 0x4 - core index']
  #allocation1 [shape = 'u32[144,128]{1,0:T(1,128)}', space=vmem, size = 0x12000, scoped, tag = 'internal scratch']
  %s0 = inlined_call_operand.vmem [shape: f32[2,4,9,9,4], index: 0, kind: input, shape index: {}]
  %s1 = inlined_call_operand.vmem [shape: f32[8,8,1], index: 1, kind: input, shape index: {}]
  %s2 = inlined_call_operand.vmem [shape: f32[2,8,8,4], index: 2, kind: output, shape index: {}]
  %s3 = sld [smem:[#allocation0]]
  $region41: #{multiscale_discriminator_forward.11} parent=0
    _
  %s5 = ssub.s32 1, %s3
  %s6 = scalar_select 0, %s5, %s3
  loop: start=0, step=1, limit=4
  $region2: #{multiscale_discriminator_forward.11} parent=0 // loop_pre_header
    _
  $region3: #{multiscale_discriminator_forward.11} parent=0 // loop_header
    %s8 = sphi 0, %s12
    %p9 = scmp.ge.s32.totalorder %s8, 4
    %s18 = sphi 0, %s20
    %s21 = sphi 0, %s18
    %s22 = sphi 0, %s21
    %s38 = sphi 0, %s22
    %s42 = sphi 0, %s42
    %s44 = sphi 0, %s42
    %s45 = sphi 0, %s44
    %s59 = sphi 0, %s45
    %s65 = sphi 0, %s67
    %s68 = sphi 0, %s65
    %s69 = sphi 0, %s68
    %s85 = sphi 0, %s69
  $region4: #{multiscale_discriminator_forward.11} parent=0 // loop_header_branch
    %11 = sbr.rel (%p9) target = $region8
  $region5: #{multiscale_discriminator_forward.11} parent=0 // loop_body
    %s13 = ssub.s32 %s8, 1
    %s14 = ssub.s32 %s8, 2
    %s15 = sadd.s32 %s8, 1
    %s16 = ssub.s32 %s8, %s15
    %p17 = scmp.eq.s32.totalorder %s16, 0
    %s19 = sadd.s32 %s18, 1
    %s20 = scalar_select %p17, %s18, %s19
    %p23 = pneg %p17
    %p24 = scmp.eq.s32.totalorder %s8, 1
    %p25 = por %p23, %p24
    %p26 = scmp.ne.s32.totalorder %s18, %s21
    %p27 = scmp.eq.s32.totalorder %s8, 0
    %p28 = por %p26, %p27
    %p29 = scmp.ne.s32.totalorder %s18, %s21
    %p30 = scmp.eq.s32.totalorder %s13, 1
    %p31 = por %p29, %p30
    %p32 = scmp.ne.s32.totalorder %s21, %s22
    %p33 = scmp.eq.s32.totalorder %s13, 0
    %p34 = por %p32, %p33
    %p35 = scmp.ne.s32.totalorder %s21, %s22
    %p36 = scmp.eq.s32.totalorder %s14, 1
    %p37 = por %p35, %p36
    %p39 = scmp.ne.s32.totalorder %s22, %s38
    %p40 = scmp.eq.s32.totalorder %s14, 0
    %p41 = por %p39, %p40
    %s43 = sadd.s32 %s42, 1
    %p46 = scmp.eq.s32.totalorder %s8, 1
    %p47 = scmp.ne.s32.totalorder %s42, %s44
    %p48 = scmp.eq.s32.totalorder %s8, 0
    %p49 = por %p47, %p48
    %p50 = scmp.ne.s32.totalorder %s42, %s44
    %p51 = scmp.eq.s32.totalorder %s13, 1
    %p52 = por %p50, %p51
    %p53 = scmp.ne.s32.totalorder %s44, %s45
    %p54 = scmp.eq.s32.totalorder %s13, 0
    %p55 = por %p53, %p54
    %p56 = scmp.ne.s32.totalorder %s44, %s45
    %p57 = scmp.eq.s32.totalorder %s14, 1
    %p58 = por %p56, %p57
    %p60 = scmp.ne.s32.totalorder %s45, %s59
    %p61 = scmp.eq.s32.totalorder %s14, 0
    %p62 = por %p60, %p61
    %s63 = ssub.s32 %s8, %s15
    %p64 = scmp.eq.s32.totalorder %s63, 0
    %s66 = sadd.s32 %s65, 1
    %s67 = scalar_select %p64, %s65, %s66
    %p70 = pneg %p64
    %p71 = scmp.eq.s32.totalorder %s8, 1
    %p72 = por %p70, %p71
    %p73 = scmp.ne.s32.totalorder %s65, %s68
    %p74 = scmp.eq.s32.totalorder %s8, 0
    %p75 = por %p73, %p74
    %p76 = scmp.ne.s32.totalorder %s65, %s68
    %p77 = scmp.eq.s32.totalorder %s13, 1
    %p78 = por %p76, %p77
    %p79 = scmp.ne.s32.totalorder %s68, %s69
    %p80 = scmp.eq.s32.totalorder %s13, 0
    %p81 = por %p79, %p80
    %p82 = scmp.ne.s32.totalorder %s68, %s69
    %p83 = scmp.eq.s32.totalorder %s14, 1
    %p84 = por %p82, %p83
    %p86 = scmp.ne.s32.totalorder %s69, %s85
    %p87 = scmp.eq.s32.totalorder %s14, 0
    %p88 = por %p86, %p87
    %p89 = scmp.le.s32.totalorder 1, %s8
    %p90 = scmp.lt.s32.totalorder %s8, 3
    %p91 = pnand %p89, %p90
    %p92 = pneg %p91
    // Predicated region
    $region9: #{multiscale_discriminator_forward.11} parent=5 // pred_check
      _
    $region10: #{multiscale_discriminator_forward.11} parent=5 // pred_check_branch
      %94 = sbr.rel (%p91) target = $region12
    $region11: #{multiscale_discriminator_forward.11} parent=5 // pred_region
      %s95 = ssub.s32 %s8, 1
      // Predicated region
      $region13: #{multiscale_discriminator_forward.11} parent=11 // pred_check
        %p96 = pneg %p55
      $region14: #{multiscale_discriminator_forward.11} parent=11 // pred_check_branch
        %98 = sbr.rel (%p96) target = $region16
      $region15: #{multiscale_discriminator_forward.11} parent=11 // pred_region
        _
      $region16: #{multiscale_discriminator_forward.11} parent=11 // pred_fallthru
        _
    $region12: #{multiscale_discriminator_forward.11} parent=5 // pred_fallthru
      _
    %p99 = scmp.lt.s32.totalorder %s8, 2
    // Predicated region
    $region17: #{multiscale_discriminator_forward.11} parent=5 // pred_check
      %p100 = pneg %p99
    $region18: #{multiscale_discriminator_forward.11} parent=5 // pred_check_branch
      %102 = sbr.rel (%p100) target = $region20
    $region19: #{multiscale_discriminator_forward.11} parent=5 // pred_region
      // Predicated region
      $region21: #{multiscale_discriminator_forward.11} parent=19 // pred_check
        %p103 = pneg %p28
      $region22: #{multiscale_discriminator_forward.11} parent=19 // pred_check_branch
        %105 = sbr.rel (%p103) target = $region24
      $region23: #{multiscale_discriminator_forward.11} parent=19 // pred_region
        %p106 = scmp.lt.s32.totalorder %s8, 1
        %s107 = scalar_select %p106, %s8, 1
        %s108 = smul.addr %s107, 72
        %s109 = smul.addr %s108, 8
        %s110 = scalar_lea.vmem %s0, %s109
      $region24: #{multiscale_discriminator_forward.11} parent=19 // pred_fallthru
        _
    $region20: #{multiscale_discriminator_forward.11} parent=5 // pred_fallthru
      _
    %p111 = scmp.le.s32.totalorder 1, %s8
    %p112 = scmp.lt.s32.totalorder %s8, 3
    %p113 = pnand %p111, %p112
    %p114 = pneg %p113
    // Predicated region
    $region25: #{multiscale_discriminator_forward.11} parent=5 // pred_check
      _
    $region26: #{multiscale_discriminator_forward.11} parent=5 // pred_check_branch
      %116 = sbr.rel (%p113) target = $region28
    $region27: #{multiscale_discriminator_forward.11} parent=5 // pred_region
      %s117 = ssub.s32 %s8, 1
      %p118 = scmp.lt.s32.totalorder %s13, 1
      %s119 = scalar_select %p118, %s13, 1
      %s120 = smul.addr %s119, 72
      %s121 = smul.addr %s120, 8
      %s122 = scalar_lea.vmem %s0, %s121
      %p123 = pneg %p34
      %p124 = pneg %p31
      %p125 = pneg %p55
      %p126 = pneg %p52
      %p127 = pneg %p81
      %p128 = pneg %p78
      %p129 = scmp.lt.s32.totalorder %s13, 1
      %s130 = scalar_select %p129, %s13, 1
      %s131 = smul.addr %s130, 8
      %s132 = smul.addr %s131, 8
      %s133 = scalar_lea.vmem %s2, %s132
      %p134 = scmp.lt.s32.totalorder %s13, 1
      %s135 = scalar_select %p134, %s13, 1
      %s136 = smul.addr %s135, 72
      %s137 = smul.addr %s136, 8
      %s138 = scalar_lea.vmem %s0, %s137
      %p139 = scmp.lt.s32.totalorder %s13, 1
      %s140 = scalar_select %p139, %s13, 1
      %s141 = smul.addr %s140, 8
      %s142 = smul.addr %s141, 8
      %s143 = scalar_lea.vmem %s2, %s142
      %s144 = scalar_lea.vmem %s138, 432
      %v145 = vld [vmem:[%s144] sm:$0xff]
      %v146 = vld [vmem:[%s144 + $0x10] sm:$0xff]
      %v147 = vld [vmem:[%s144 + $0x20] sm:$0xff]
      %v148 = vld [vmem:[%s144 + $0x30] sm:$0xff]
      %v149 = vld [vmem:[%s144 + $0x40] sm:$0xff]
      %v150 = vld [vmem:[%s144 + $0x50] sm:$0xff]
      %v151 = vld [vmem:[%s144 + $0x60] sm:$0xff]
      %v152 = vld [vmem:[%s144 + $0x70] sm:$0xff]
      %v153 = vld [vmem:[%s138] sm:$0xff]
      %v154 = vld [vmem:[%s138 + $0x10] sm:$0xff]
      %v155 = vld [vmem:[%s138 + $0x20] sm:$0xff]
      %v156 = vld [vmem:[%s138 + $0x30] sm:$0xff]
      %v157 = vld [vmem:[%s138 + $0x40] sm:$0xff]
      %v158 = vld [vmem:[%s138 + $0x50] sm:$0xff]
      %v159 = vld [vmem:[%s138 + $0x60] sm:$0xff]
      %v160 = vld [vmem:[%s138 + $0x70] sm:$0xff]
      %v161 = vld [vmem:[%s138 + $0x1] sm:$0xff]
      %v162 = vld [vmem:[%s138 + $0x11] sm:$0xff]
      %v163 = vld [vmem:[%s138 + $0x21] sm:$0xff]
      %v164 = vld [vmem:[%s138 + $0x31] sm:$0xff]
      %v165 = vld [vmem:[%s138 + $0x41] sm:$0xff]
      %v166 = vld [vmem:[%s138 + $0x51] sm:$0xff]
      %v167 = vld [vmem:[%s138 + $0x61] sm:$0xff]
      %v168 = vld [vmem:[%s138 + $0x71] sm:$0xff]
      %v169 = vadd.f32 %v153, %v161
      %v170 = vadd.f32 %v154, %v162
      %v171 = vadd.f32 %v155, %v163
      %v172 = vadd.f32 %v156, %v164
      %v173 = vadd.f32 %v157, %v165
      %v174 = vadd.f32 %v158, %v166
      %v175 = vadd.f32 %v159, %v167
      %v176 = vadd.f32 %v160, %v168
      %s177 = scalar_lea.vmem %s138, 16
      %v178 = vld [vmem:[%s177] sm:$0xff]
      %v179 = vld [vmem:[%s177 + $0x10] sm:$0xff]
      %v180 = vld [vmem:[%s177 + $0x20] sm:$0xff]
      %v181 = vld [vmem:[%s177 + $0x30] sm:$0xff]
      %v182 = vld [vmem:[%s177 + $0x40] sm:$0xff]
      %v183 = vld [vmem:[%s177 + $0x50] sm:$0xff]
      %v184 = vld [vmem:[%s177 + $0x60] sm:$0xff]
      %v185 = vld [vmem:[%s177 + $0x70] sm:$0xff]
      %v186 = vadd.f32 %v169, %v178
      %v187 = vadd.f32 %v170, %v179
      %v188 = vadd.f32 %v171, %v180
      %v189 = vadd.f32 %v172, %v181
      %v190 = vadd.f32 %v173, %v182
      %v191 = vadd.f32 %v174, %v183
      %v192 = vadd.f32 %v175, %v184
      %v193 = vadd.f32 %v176, %v185
      %v194 = vld [vmem:[%s177 + $0x1] sm:$0xff]
      %v195 = vld [vmem:[%s177 + $0x11] sm:$0xff]
      %v196 = vld [vmem:[%s177 + $0x21] sm:$0xff]
      %v197 = vld [vmem:[%s177 + $0x31] sm:$0xff]
      %v198 = vld [vmem:[%s177 + $0x41] sm:$0xff]
      %v199 = vld [vmem:[%s177 + $0x51] sm:$0xff]
      %v200 = vld [vmem:[%s177 + $0x61] sm:$0xff]
      %v201 = vld [vmem:[%s177 + $0x71] sm:$0xff]
      %v202 = vadd.f32 %v186, %v194
      %v203 = vadd.f32 %v187, %v195
      %v204 = vadd.f32 %v188, %v196
      %v205 = vadd.f32 %v189, %v197
      %v206 = vadd.f32 %v190, %v198
      %v207 = vadd.f32 %v191, %v199
      %v208 = vadd.f32 %v192, %v200
      %v209 = vadd.f32 %v193, %v201
      %s210 = scalar_lea.vmem %s138, 144
      %v211 = vld [vmem:[%s210] sm:$0xff]
      %v212 = vld [vmem:[%s210 + $0x10] sm:$0xff]
      %v213 = vld [vmem:[%s210 + $0x20] sm:$0xff]
      %v214 = vld [vmem:[%s210 + $0x30] sm:$0xff]
      %v215 = vld [vmem:[%s210 + $0x40] sm:$0xff]
      %v216 = vld [vmem:[%s210 + $0x50] sm:$0xff]
      %v217 = vld [vmem:[%s210 + $0x60] sm:$0xff]
      %v218 = vld [vmem:[%s210 + $0x70] sm:$0xff]
      %v219 = vadd.f32 %v202, %v211
      %v220 = vadd.f32 %v203, %v212
      %v221 = vadd.f32 %v204, %v213
      %v222 = vadd.f32 %v205, %v214
      %v223 = vadd.f32 %v206, %v215
      %v224 = vadd.f32 %v207, %v216
      %v225 = vadd.f32 %v208, %v217
      %v226 = vadd.f32 %v209, %v218
      %s227 = scalar_lea.vmem %s138, 160
      %v228 = vld [vmem:[%s227] sm:$0xff]
      %v229 = vld [vmem:[%s227 + $0x10] sm:$0xff]
      %v230 = vld [vmem:[%s227 + $0x20] sm:$0xff]
      %v231 = vld [vmem:[%s227 + $0x30] sm:$0xff]
      %v232 = vld [vmem:[%s227 + $0x40] sm:$0xff]
      %v233 = vld [vmem:[%s227 + $0x50] sm:$0xff]
      %v234 = vld [vmem:[%s227 + $0x60] sm:$0xff]
      %v235 = vld [vmem:[%s227 + $0x70] sm:$0xff]
      %v236 = vadd.f32 %v219, %v228
      %v237 = vadd.f32 %v220, %v229
      %v238 = vadd.f32 %v221, %v230
      %v239 = vadd.f32 %v222, %v231
      %v240 = vadd.f32 %v223, %v232
      %v241 = vadd.f32 %v224, %v233
      %v242 = vadd.f32 %v225, %v234
      %v243 = vadd.f32 %v226, %v235
      %s244 = scalar_lea.vmem %s138, 288
      %v245 = vld [vmem:[%s244] sm:$0xff]
      %v246 = vld [vmem:[%s244 + $0x10] sm:$0xff]
      %v247 = vld [vmem:[%s244 + $0x20] sm:$0xff]
      %v248 = vld [vmem:[%s244 + $0x30] sm:$0xff]
      %v249 = vld [vmem:[%s244 + $0x40] sm:$0xff]
      %v250 = vld [vmem:[%s244 + $0x50] sm:$0xff]
      %v251 = vld [vmem:[%s244 + $0x60] sm:$0xff]
      %v252 = vld [vmem:[%s244 + $0x70] sm:$0xff]
      %v253 = vadd.f32 %v236, %v245
      %v254 = vadd.f32 %v237, %v246
      %v255 = vadd.f32 %v238, %v247
      %v256 = vadd.f32 %v239, %v248
      %v257 = vadd.f32 %v240, %v249
      %v258 = vadd.f32 %v241, %v250
      %v259 = vadd.f32 %v242, %v251
      %v260 = vadd.f32 %v243, %v252
      %v261 = vld [vmem:[%s244 + $0x1] sm:$0xff]
      %v262 = vld [vmem:[%s244 + $0x11] sm:$0xff]
      %v263 = vld [vmem:[%s244 + $0x21] sm:$0xff]
      %v264 = vld [vmem:[%s244 + $0x31] sm:$0xff]
      %v265 = vld [vmem:[%s244 + $0x41] sm:$0xff]
      %v266 = vld [vmem:[%s244 + $0x51] sm:$0xff]
      %v267 = vld [vmem:[%s244 + $0x61] sm:$0xff]
      %v268 = vld [vmem:[%s244 + $0x71] sm:$0xff]
      %v269 = vadd.f32 %v253, %v261
      %v270 = vadd.f32 %v254, %v262
      %v271 = vadd.f32 %v255, %v263
      %v272 = vadd.f32 %v256, %v264
      %v273 = vadd.f32 %v257, %v265
      %v274 = vadd.f32 %v258, %v266
      %v275 = vadd.f32 %v259, %v267
      %v276 = vadd.f32 %v260, %v268
      %v277 = vadd.f32 %v269, %v145
      %v278 = vadd.f32 %v270, %v146
      %v279 = vadd.f32 %v271, %v147
      %v280 = vadd.f32 %v272, %v148
      %v281 = vadd.f32 %v273, %v149
      %v282 = vadd.f32 %v274, %v150
      %v283 = vadd.f32 %v275, %v151
      %v284 = vadd.f32 %v276, %v152
      %v285 = vld [vmem:[%s1] sm:$0xff]
      %v286 = vld [vmem:[%s1 + $0x8] sm:$0xff]
      %v287 = vld [vmem:[%s1 + $0x10] sm:$0xff]
      %v288 = vld [vmem:[%s1 + $0x18] sm:$0xff]
      %v289 = vld [vmem:[%s1 + $0x20] sm:$0xff]
      %v290 = vld [vmem:[%s1 + $0x28] sm:$0xff]
      %v291 = vld [vmem:[%s1 + $0x30] sm:$0xff]
      %v292 = vld [vmem:[%s1 + $0x38] sm:$0xff]
      %294 = vset.pattern.permute.xlu0 0
      %295 = vperm.xlu0 %294, %v285
      %v296 = vpop.permute.xlu0 %295
      %299 = vset.pattern.permute.xlu0 0
      %300 = vperm.xlu0 %299, %v286
      %v301 = vpop.permute.xlu0 %300
      %304 = vset.pattern.permute.xlu0 0
      %305 = vperm.xlu0 %304, %v287
      %v306 = vpop.permute.xlu0 %305
      %309 = vset.pattern.permute.xlu0 0
      %310 = vperm.xlu0 %309, %v288
      %v311 = vpop.permute.xlu0 %310
      %314 = vset.pattern.permute.xlu0 0
      %315 = vperm.xlu0 %314, %v289
      %v316 = vpop.permute.xlu0 %315
      %319 = vset.pattern.permute.xlu0 0
      %320 = vperm.xlu0 %319, %v290
      %v321 = vpop.permute.xlu0 %320
      %324 = vset.pattern.permute.xlu0 0
      %325 = vperm.xlu0 %324, %v291
      %v326 = vpop.permute.xlu0 %325
      %329 = vset.pattern.permute.xlu0 0
      %330 = vperm.xlu0 %329, %v292
      %v331 = vpop.permute.xlu0 %330
      %v333 = vmul.f32 %v277, %v296
      %v334 = vmul.f32 %v278, %v301
      %v335 = vmul.f32 %v279, %v306
      %v336 = vmul.f32 %v280, %v311
      %v337 = vmul.f32 %v281, %v316
      %v338 = vmul.f32 %v282, %v321
      %v339 = vmul.f32 %v283, %v326
      %v340 = vmul.f32 %v284, %v331
      %vm341 = vcmask 31744
      %342 = vst.msk [vmem:[%s143] sm:$0xff] %vm341, %v333
      %343 = vst.msk [vmem:[%s143 + $0x8] sm:$0xff] %vm341, %v334
      %344 = vst.msk [vmem:[%s143 + $0x10] sm:$0xff] %vm341, %v335
      %345 = vst.msk [vmem:[%s143 + $0x18] sm:$0xff] %vm341, %v336
      %346 = vst.msk [vmem:[%s143 + $0x20] sm:$0xff] %vm341, %v337
      %347 = vst.msk [vmem:[%s143 + $0x28] sm:$0xff] %vm341, %v338
      %348 = vst.msk [vmem:[%s143 + $0x30] sm:$0xff] %vm341, %v339
      %349 = vst.msk [vmem:[%s143 + $0x38] sm:$0xff] %vm341, %v340
      %p350 = scmp.lt.s32.totalorder %s13, 1
      %s351 = scalar_select %p350, %s13, 1
      %s352 = smul.addr %s351, 8
      %s353 = smul.addr %s352, 8
      %s354 = scalar_lea.vmem %s2, %s353
      // Predicated region
      $region29: #{multiscale_discriminator_forward.11} parent=27 // pred_check
        %p355 = pneg %p78
      $region30: #{multiscale_discriminator_forward.11} parent=27 // pred_check_branch
        %357 = sbr.rel (%p355) target = $region32
      $region31: #{multiscale_discriminator_forward.11} parent=27 // pred_region
        _
      $region32: #{multiscale_discriminator_forward.11} parent=27 // pred_fallthru
        _
    $region28: #{multiscale_discriminator_forward.11} parent=5 // pred_fallthru
      _
    %p358 = scmp.le.s32.totalorder 2, %s8
    // Predicated region
    $region33: #{multiscale_discriminator_forward.11} parent=5 // pred_check
      %p359 = pneg %p358
    $region34: #{multiscale_discriminator_forward.11} parent=5 // pred_check_branch
      %361 = sbr.rel (%p359) target = $region36
    $region35: #{multiscale_discriminator_forward.11} parent=5 // pred_region
      %s362 = ssub.s32 %s8, 2
      // Predicated region
      $region37: #{multiscale_discriminator_forward.11} parent=35 // pred_check
        %p363 = pneg %p84
      $region38: #{multiscale_discriminator_forward.11} parent=35 // pred_check_branch
        %365 = sbr.rel (%p363) target = $region40
      $region39: #{multiscale_discriminator_forward.11} parent=35 // pred_region
        %p366 = scmp.lt.s32.totalorder %s14, 1
        %s367 = scalar_select %p366, %s14, 1
        %s368 = smul.addr %s367, 8
        %s369 = smul.addr %s368, 8
        %s370 = scalar_lea.vmem %s2, %s369
      $region40: #{multiscale_discriminator_forward.11} parent=35 // pred_fallthru
        _
    $region36: #{multiscale_discriminator_forward.11} parent=5 // pred_fallthru
      _
  $region6: #{multiscale_discriminator_forward.11} parent=0 // loop_footer
    %s12 = sadd.s32 1, %s8
  $region7: #{multiscale_discriminator_forward.11} parent=0 // loop_footer_branch
    %7 = sbr.rel target = $region3
  $region8: #{multiscale_discriminator_forward.11} parent=0 // loop_exit
    _

// kernel: multiscale_discriminator_forward.12
$region0: #{multiscale_discriminator_forward.12}
  #allocation0 [shape = 'u32[]', space=smem, size = 0x4, offset = 0x4, fixed_abs, tag = 'smem constant byte address 0x4 - core index']
  #allocation1 [shape = 'u32[144,128]{1,0:T(1,128)}', space=vmem, size = 0x12000, scoped, tag = 'internal scratch']
  %s0 = inlined_call_operand.vmem [shape: bf16[32,128], index: 0, kind: input, shape index: {}]
  %s1 = inlined_call_operand.vmem [shape: bf16[128,128], index: 1, kind: input, shape index: {}]
  %s2 = inlined_call_operand.vmem [shape: f32[1,128], index: 2, kind: input, shape index: {}]
  %s3 = inlined_call_operand.vmem [shape: bf16[32,128], index: 3, kind: output, shape index: {}]
  %s4 = sld [smem:[#allocation0]]
  $region22: #{multiscale_discriminator_forward.12} parent=0
    _
  %s6 = ssub.s32 1, %s4
  %s7 = scalar_select 0, %s6, %s4
  // Predicated region
  $region2: #{multiscale_discriminator_forward.12} parent=0 // pred_check
    _
  $region3: #{multiscale_discriminator_forward.12} parent=0 // pred_check_branch
    %9 = sbr.rel (0) target = $region5
  $region4: #{multiscale_discriminator_forward.12} parent=0 // pred_region
    _
  $region5: #{multiscale_discriminator_forward.12} parent=0 // pred_fallthru
    _
  // Predicated region
  $region6: #{multiscale_discriminator_forward.12} parent=0 // pred_check
    _
  $region7: #{multiscale_discriminator_forward.12} parent=0 // pred_check_branch
    %11 = sbr.rel (0) target = $region9
  $region8: #{multiscale_discriminator_forward.12} parent=0 // pred_region
    _
  $region9: #{multiscale_discriminator_forward.12} parent=0 // pred_fallthru
    _
  // Predicated region
  $region10: #{multiscale_discriminator_forward.12} parent=0 // pred_check
    _
  $region11: #{multiscale_discriminator_forward.12} parent=0 // pred_check_branch
    %13 = sbr.rel (0) target = $region13
  $region12: #{multiscale_discriminator_forward.12} parent=0 // pred_region
    _
  $region13: #{multiscale_discriminator_forward.12} parent=0 // pred_fallthru
    _
  %v15 = vld [vmem:[%s0] sm:$0xf]
  %v16 = vld [vmem:[%s0 + $0x4] sm:$0xf]
  %v17 = vld [vmem:[%s0 + $0x8] sm:$0xf]
  %v18 = vld [vmem:[%s0 + $0xc] sm:$0xf]
  %v19 = vld [vmem:[%s1] sm:$0xf]
  %v20 = vld [vmem:[%s1 + $0x4] sm:$0xf]
  %v21 = vld [vmem:[%s1 + $0x8] sm:$0xf]
  %v22 = vld [vmem:[%s1 + $0xc] sm:$0xf]
  %v23 = vld [vmem:[%s1 + $0x10] sm:$0xf]
  %v24 = vld [vmem:[%s1 + $0x14] sm:$0xf]
  %v25 = vld [vmem:[%s1 + $0x18] sm:$0xf]
  %v26 = vld [vmem:[%s1 + $0x1c] sm:$0xf]
  %v27 = vld [vmem:[%s1 + $0x20] sm:$0xf]
  %v28 = vld [vmem:[%s1 + $0x24] sm:$0xf]
  %v29 = vld [vmem:[%s1 + $0x28] sm:$0xf]
  %v30 = vld [vmem:[%s1 + $0x2c] sm:$0xf]
  %v31 = vld [vmem:[%s1 + $0x30] sm:$0xf]
  %v32 = vld [vmem:[%s1 + $0x34] sm:$0xf]
  %v33 = vld [vmem:[%s1 + $0x38] sm:$0xf]
  %v34 = vld [vmem:[%s1 + $0x3c] sm:$0xf]
  %v35 = vld [vmem:[%s2] sm:$0x1]
  %v37 = vlaneseq
  %v38 = vshrl.u32 %v37, 7
  %v39 = vsub.s32 0, %v38
  %v40 = vrot.slane %v35, %v39
  %v46 = vunpack.c.l.b16 %v15
  %v47 = vunpack.c.l.b16 %v16
  %v48 = vunpack.c.l.b16 %v17
  %v49 = vunpack.c.l.b16 %v18
  %v50 = vpack.c.b16 %v47, %v46
  %v51 = vpack.c.b16 %v49, %v48
  %v70 = vunpack.c.l.b16 %v19
  %v71 = vunpack.c.l.b16 %v20
  %v72 = vunpack.c.l.b16 %v21
  %v73 = vunpack.c.l.b16 %v22
  %v74 = vunpack.c.l.b16 %v23
  %v75 = vunpack.c.l.b16 %v24
  %v76 = vunpack.c.l.b16 %v25
  %v77 = vunpack.c.l.b16 %v26
  %v78 = vunpack.c.l.b16 %v27
  %v79 = vunpack.c.l.b16 %v28
  %v80 = vunpack.c.l.b16 %v29
  %v81 = vunpack.c.l.b16 %v30
  %v82 = vunpack.c.l.b16 %v31
  %v83 = vunpack.c.l.b16 %v32
  %v84 = vunpack.c.l.b16 %v33
  %v85 = vunpack.c.l.b16 %v34
  %v86 = vpack.c.b16 %v71, %v70
  %v87 = vpack.c.b16 %v73, %v72
  %v88 = vpack.c.b16 %v75, %v74
  %v89 = vpack.c.b16 %v77, %v76
  %v90 = vpack.c.b16 %v79, %v78
  %v91 = vpack.c.b16 %v81, %v80
  %v92 = vpack.c.b16 %v83, %v82
  %v93 = vpack.c.b16 %v85, %v84
  %102 = vmatprep.subr.bf16.mxu0 0
  %103 = vmatpush1.bf16.msra.mxu0 %v86
  %104 = vmatprep.subr.bf16.mxu0 0
  %105 = vmatpush1.bf16.msra.mxu0 %v87
  %106 = vmatprep.subr.bf16.mxu0 0
  %107 = vmatpush1.bf16.msra.mxu0 %v88
  %108 = vmatprep.subr.bf16.mxu0 0
  %109 = vmatpush1.bf16.msra.mxu0 %v89
  %110 = vmatprep.subr.bf16.mxu0 0
  %111 = vmatpush1.bf16.msra.mxu0 %v90
  %112 = vmatprep.subr.bf16.mxu0 0
  %113 = vmatpush1.bf16.msra.mxu0 %v91
  %114 = vmatprep.subr.bf16.mxu0 0
  %115 = vmatpush1.bf16.msra.mxu0 %v92
  %116 = vmatprep.subr.bf16.mxu0 0
  %117 = vmatpush1.bf16.msra.mxu0 %v93
  %118 = vmatprep.subr.bf16.mxu0 0
  %119 = vmatpush1.bf16.msra.mxu0 0
  %120 = vmatprep.subr.bf16.mxu0 0
  %121 = vmatpush1.bf16.msra.mxu0 0
  %122 = vmatprep.subr.bf16.mxu0 0
  %123 = vmatpush1.bf16.msra.mxu0 0
  %124 = vmatprep.subr.bf16.mxu0 0
  %125 = vmatpush1.bf16.msra.mxu0 0
  %126 = vmatprep.subr.bf16.mxu0 0
  %127 = vmatpush1.bf16.msra.mxu0 0
  %128 = vmatprep.subr.bf16.mxu0 0
  %129 = vmatpush1.bf16.msra.mxu0 0
  %130 = vmatprep.subr.bf16.mxu0 0
  %131 = vmatpush1.bf16.msra.mxu0 0
  %132 = vmatprep.subr.bf16.mxu0 0
  %133 = vmatpush1.bf16.msra.mxu0 0
  %134 = vmatprep.mubr.bf16.mxu0 0
  %135 = vmatmul.mubr.bf16.gmra.mrb[0].mxu0 %v50
  %v136 = vpop.f32.mrb[0].mxu0
  %v137 = vadd.f32 %v40, %v136
  %v138 = vpop.f32.mrb[0].mxu0
  %v139 = vpop.f32.mrb[0].mxu0
  %v140 = vadd.f32 %v40, %v139
  %v141 = vpop.f32.mrb[0].mxu0
  %142 = vmatprep.mubr.bf16.mxu0 0
  %143 = vmatmul.mubr.bf16.gmra.mrb[0].mxu0 %v51
  %v144 = vpop.f32.mrb[0].mxu0
  %v145 = vadd.f32 %v40, %v144
  %v146 = vpop.f32.mrb[0].mxu0
  %v147 = vpop.f32.mrb[0].mxu0
  %v148 = vadd.f32 %v40, %v147
  %v149 = vpop.f32.mrb[0].mxu0
  %150 = vdwg.mxu0
  %vm151 = vcmp.gt.f32.partialorder %v137, 0.0
  %vm152 = vcmp.gt.f32.partialorder %v140, 0.0
  %vm153 = vcmp.gt.f32.partialorder %v145, 0.0
  %vm154 = vcmp.gt.f32.partialorder %v148, 0.0
  %v155 = vmul.f32 %v137, 0.2
  %v156 = vmul.f32 %v140, 0.2
  %v157 = vmul.f32 %v145, 0.2
  %v158 = vmul.f32 %v148, 0.2
  %v159 = vsel %vm151, %v137, %v155
  %v160 = vsel %vm152, %v140, %v156
  %v161 = vsel %vm153, %v145, %v157
  %v162 = vsel %vm154, %v148, %v158
  %v163 = vpack.c.bf16 %v160, %v159
  %v164 = vpack.c.bf16 %v162, %v161
  %v167 = vunpack.c.l.b16 %v163
  %v168 = vunpack.c.h.b16 %v163
  %v169 = vunpack.c.l.b16 %v164
  %v170 = vunpack.c.h.b16 %v164
  %v171 = vpack.c.b16 %v167, %v167
  %v172 = vpack.c.b16 %v168, %v168
  %v173 = vpack.c.b16 %v169, %v169
  %v174 = vpack.c.b16 %v170, %v170
  %179 = vst [vmem:[%s3] sm:$0xf] %v171
  %180 = vst [vmem:[%s3 + $0x4] sm:$0xf] %v172
  %181 = vst [vmem:[%s3 + $0x8] sm:$0xf] %v173
  %182 = vst [vmem:[%s3 + $0xc] sm:$0xf] %v174
  // Predicated region
  $region14: #{multiscale_discriminator_forward.12} parent=0 // pred_check
    _
  $region15: #{multiscale_discriminator_forward.12} parent=0 // pred_check_branch
    %184 = sbr.rel (0) target = $region17
  $region16: #{multiscale_discriminator_forward.12} parent=0 // pred_region
    _
  $region17: #{multiscale_discriminator_forward.12} parent=0 // pred_fallthru
    _
  // Predicated region
  $region18: #{multiscale_discriminator_forward.12} parent=0 // pred_check
    _
  $region19: #{multiscale_discriminator_forward.12} parent=0 // pred_check_branch
    %186 = sbr.rel (0) target = $region21
  $region20: #{multiscale_discriminator_forward.12} parent=0 // pred_region
    _
  $region21: #{multiscale_discriminator_forward.12} parent=0 // pred_fallthru
    _

// kernel: multiscale_discriminator_forward.13
$region0: #{multiscale_discriminator_forward.13}
  #allocation0 [shape = 'u32[]', space=smem, size = 0x4, offset = 0x4, fixed_abs, tag = 'smem constant byte address 0x4 - core index']
  #allocation1 [shape = 'u32[144,128]{1,0:T(1,128)}', space=vmem, size = 0x12000, scoped, tag = 'internal scratch']
  %s0 = inlined_call_operand.vmem [shape: bf16[32,128], index: 0, kind: input, shape index: {}]
  %s1 = inlined_call_operand.vmem [shape: bf16[128,128], index: 1, kind: input, shape index: {}]
  %s2 = inlined_call_operand.vmem [shape: f32[1,128], index: 2, kind: input, shape index: {}]
  %s3 = inlined_call_operand.vmem [shape: bf16[32,128], index: 3, kind: output, shape index: {}]
  %s4 = sld [smem:[#allocation0]]
  $region22: #{multiscale_discriminator_forward.13} parent=0
    _
  %s6 = ssub.s32 1, %s4
  %s7 = scalar_select 0, %s6, %s4
  // Predicated region
  $region2: #{multiscale_discriminator_forward.13} parent=0 // pred_check
    _
  $region3: #{multiscale_discriminator_forward.13} parent=0 // pred_check_branch
    %9 = sbr.rel (0) target = $region5
  $region4: #{multiscale_discriminator_forward.13} parent=0 // pred_region
    _
  $region5: #{multiscale_discriminator_forward.13} parent=0 // pred_fallthru
    _
  // Predicated region
  $region6: #{multiscale_discriminator_forward.13} parent=0 // pred_check
    _
  $region7: #{multiscale_discriminator_forward.13} parent=0 // pred_check_branch
    %11 = sbr.rel (0) target = $region9
  $region8: #{multiscale_discriminator_forward.13} parent=0 // pred_region
    _
  $region9: #{multiscale_discriminator_forward.13} parent=0 // pred_fallthru
    _
  // Predicated region
  $region10: #{multiscale_discriminator_forward.13} parent=0 // pred_check
    _
  $region11: #{multiscale_discriminator_forward.13} parent=0 // pred_check_branch
    %13 = sbr.rel (0) target = $region13
  $region12: #{multiscale_discriminator_forward.13} parent=0 // pred_region
    _
  $region13: #{multiscale_discriminator_forward.13} parent=0 // pred_fallthru
    _
  %v15 = vld [vmem:[%s0] sm:$0xf]
  %v16 = vld [vmem:[%s0 + $0x4] sm:$0xf]
  %v17 = vld [vmem:[%s0 + $0x8] sm:$0xf]
  %v18 = vld [vmem:[%s0 + $0xc] sm:$0xf]
  %v19 = vld [vmem:[%s1] sm:$0xf]
  %v20 = vld [vmem:[%s1 + $0x4] sm:$0xf]
  %v21 = vld [vmem:[%s1 + $0x8] sm:$0xf]
  %v22 = vld [vmem:[%s1 + $0xc] sm:$0xf]
  %v23 = vld [vmem:[%s1 + $0x10] sm:$0xf]
  %v24 = vld [vmem:[%s1 + $0x14] sm:$0xf]
  %v25 = vld [vmem:[%s1 + $0x18] sm:$0xf]
  %v26 = vld [vmem:[%s1 + $0x1c] sm:$0xf]
  %v27 = vld [vmem:[%s1 + $0x20] sm:$0xf]
  %v28 = vld [vmem:[%s1 + $0x24] sm:$0xf]
  %v29 = vld [vmem:[%s1 + $0x28] sm:$0xf]
  %v30 = vld [vmem:[%s1 + $0x2c] sm:$0xf]
  %v31 = vld [vmem:[%s1 + $0x30] sm:$0xf]
  %v32 = vld [vmem:[%s1 + $0x34] sm:$0xf]
  %v33 = vld [vmem:[%s1 + $0x38] sm:$0xf]
  %v34 = vld [vmem:[%s1 + $0x3c] sm:$0xf]
  %v35 = vld [vmem:[%s2] sm:$0x1]
  %v37 = vlaneseq
  %v38 = vshrl.u32 %v37, 7
  %v39 = vsub.s32 0, %v38
  %v40 = vrot.slane %v35, %v39
  %v46 = vunpack.c.l.b16 %v15
  %v47 = vunpack.c.l.b16 %v16
  %v48 = vunpack.c.l.b16 %v17
  %v49 = vunpack.c.l.b16 %v18
  %v50 = vpack.c.b16 %v47, %v46
  %v51 = vpack.c.b16 %v49, %v48
  %v70 = vunpack.c.l.b16 %v19
  %v71 = vunpack.c.l.b16 %v20
  %v72 = vunpack.c.l.b16 %v21
  %v73 = vunpack.c.l.b16 %v22
  %v74 = vunpack.c.l.b16 %v23
  %v75 = vunpack.c.l.b16 %v24
  %v76 = vunpack.c.l.b16 %v25
  %v77 = vunpack.c.l.b16 %v26
  %v78 = vunpack.c.l.b16 %v27
  %v79 = vunpack.c.l.b16 %v28
  %v80 = vunpack.c.l.b16 %v29
  %v81 = vunpack.c.l.b16 %v30
  %v82 = vunpack.c.l.b16 %v31
  %v83 = vunpack.c.l.b16 %v32
  %v84 = vunpack.c.l.b16 %v33
  %v85 = vunpack.c.l.b16 %v34
  %v86 = vpack.c.b16 %v71, %v70
  %v87 = vpack.c.b16 %v73, %v72
  %v88 = vpack.c.b16 %v75, %v74
  %v89 = vpack.c.b16 %v77, %v76
  %v90 = vpack.c.b16 %v79, %v78
  %v91 = vpack.c.b16 %v81, %v80
  %v92 = vpack.c.b16 %v83, %v82
  %v93 = vpack.c.b16 %v85, %v84
  %102 = vmatprep.subr.bf16.mxu0 0
  %103 = vmatpush1.bf16.msra.mxu0 %v86
  %104 = vmatprep.subr.bf16.mxu0 0
  %105 = vmatpush1.bf16.msra.mxu0 %v87
  %106 = vmatprep.subr.bf16.mxu0 0
  %107 = vmatpush1.bf16.msra.mxu0 %v88
  %108 = vmatprep.subr.bf16.mxu0 0
  %109 = vmatpush1.bf16.msra.mxu0 %v89
  %110 = vmatprep.subr.bf16.mxu0 0
  %111 = vmatpush1.bf16.msra.mxu0 %v90
  %112 = vmatprep.subr.bf16.mxu0 0
  %113 = vmatpush1.bf16.msra.mxu0 %v91
  %114 = vmatprep.subr.bf16.mxu0 0
  %115 = vmatpush1.bf16.msra.mxu0 %v92
  %116 = vmatprep.subr.bf16.mxu0 0
  %117 = vmatpush1.bf16.msra.mxu0 %v93
  %118 = vmatprep.subr.bf16.mxu0 0
  %119 = vmatpush1.bf16.msra.mxu0 0
  %120 = vmatprep.subr.bf16.mxu0 0
  %121 = vmatpush1.bf16.msra.mxu0 0
  %122 = vmatprep.subr.bf16.mxu0 0
  %123 = vmatpush1.bf16.msra.mxu0 0
  %124 = vmatprep.subr.bf16.mxu0 0
  %125 = vmatpush1.bf16.msra.mxu0 0
  %126 = vmatprep.subr.bf16.mxu0 0
  %127 = vmatpush1.bf16.msra.mxu0 0
  %128 = vmatprep.subr.bf16.mxu0 0
  %129 = vmatpush1.bf16.msra.mxu0 0
  %130 = vmatprep.subr.bf16.mxu0 0
  %131 = vmatpush1.bf16.msra.mxu0 0
  %132 = vmatprep.subr.bf16.mxu0 0
  %133 = vmatpush1.bf16.msra.mxu0 0
  %134 = vmatprep.mubr.bf16.mxu0 0
  %135 = vmatmul.mubr.bf16.gmra.mrb[0].mxu0 %v50
  %v136 = vpop.f32.mrb[0].mxu0
  %v137 = vadd.f32 %v40, %v136
  %v138 = vpop.f32.mrb[0].mxu0
  %v139 = vpop.f32.mrb[0].mxu0
  %v140 = vadd.f32 %v40, %v139
  %v141 = vpop.f32.mrb[0].mxu0
  %142 = vmatprep.mubr.bf16.mxu0 0
  %143 = vmatmul.mubr.bf16.gmra.mrb[0].mxu0 %v51
  %v144 = vpop.f32.mrb[0].mxu0
  %v145 = vadd.f32 %v40, %v144
  %v146 = vpop.f32.mrb[0].mxu0
  %v147 = vpop.f32.mrb[0].mxu0
  %v148 = vadd.f32 %v40, %v147
  %v149 = vpop.f32.mrb[0].mxu0
  %150 = vdwg.mxu0
  %v151 = vpack.c.bf16 %v140, %v137
  %v152 = vpack.c.bf16 %v148, %v145
  %v155 = vunpack.c.l.b16 %v151
  %v156 = vunpack.c.h.b16 %v151
  %v157 = vunpack.c.l.b16 %v152
  %v158 = vunpack.c.h.b16 %v152
  %v159 = vpack.c.b16 %v155, %v155
  %v160 = vpack.c.b16 %v156, %v156
  %v161 = vpack.c.b16 %v157, %v157
  %v162 = vpack.c.b16 %v158, %v158
  %167 = vst [vmem:[%s3] sm:$0xf] %v159
  %168 = vst [vmem:[%s3 + $0x4] sm:$0xf] %v160
  %169 = vst [vmem:[%s3 + $0x8] sm:$0xf] %v161
  %170 = vst [vmem:[%s3 + $0xc] sm:$0xf] %v162
  // Predicated region
  $region14: #{multiscale_discriminator_forward.13} parent=0 // pred_check
    _
  $region15: #{multiscale_discriminator_forward.13} parent=0 // pred_check_branch
    %172 = sbr.rel (0) target = $region17
  $region16: #{multiscale_discriminator_forward.13} parent=0 // pred_region
    _
  $region17: #{multiscale_discriminator_forward.13} parent=0 // pred_fallthru
    _
  // Predicated region
  $region18: #{multiscale_discriminator_forward.13} parent=0 // pred_check
    _
  $region19: #{multiscale_discriminator_forward.13} parent=0 // pred_check_branch
    %174 = sbr.rel (0) target = $region21
  $region20: #{multiscale_discriminator_forward.13} parent=0 // pred_region
    _
  $region21: #{multiscale_discriminator_forward.13} parent=0 // pred_fallthru
    _

// kernel: multiscale_discriminator_forward.14
$region0: #{multiscale_discriminator_forward.14}
  #allocation0 [shape = 'u32[]', space=smem, size = 0x4, offset = 0x4, fixed_abs, tag = 'smem constant byte address 0x4 - core index']
  #allocation1 [shape = 'u32[144,128]{1,0:T(1,128)}', space=vmem, size = 0x12000, scoped, tag = 'internal scratch']
  %s0 = inlined_call_operand.vmem [shape: bf16[2,4,16], index: 0, kind: input, shape index: {}]
  %s1 = inlined_call_operand.vmem [shape: bf16[2,4,16], index: 1, kind: output, shape index: {}]
  %s2 = sld [smem:[#allocation0]]
  $region37: #{multiscale_discriminator_forward.14} parent=0
    _
  %s4 = ssub.s32 1, %s2
  %s5 = scalar_select 0, %s4, %s2
  loop: start=0, step=1, limit=4
  $region2: #{multiscale_discriminator_forward.14} parent=0 // loop_pre_header
    _
  $region3: #{multiscale_discriminator_forward.14} parent=0 // loop_header
    %s7 = sphi 0, %s11
    %p8 = scmp.ge.s32.totalorder %s7, 4
    %s17 = sphi 0, %s19
    %s20 = sphi 0, %s17
    %s21 = sphi 0, %s20
    %s37 = sphi 0, %s21
    %s43 = sphi 0, %s45
    %s46 = sphi 0, %s43
    %s47 = sphi 0, %s46
    %s63 = sphi 0, %s47
  $region4: #{multiscale_discriminator_forward.14} parent=0 // loop_header_branch
    %10 = sbr.rel (%p8) target = $region8
  $region5: #{multiscale_discriminator_forward.14} parent=0 // loop_body
    %s12 = ssub.s32 %s7, 1
    %s13 = ssub.s32 %s7, 2
    %s14 = sadd.s32 %s7, 1
    %s15 = ssub.s32 %s7, %s14
    %p16 = scmp.eq.s32.totalorder %s15, 0
    %s18 = sadd.s32 %s17, 1
    %s19 = scalar_select %p16, %s17, %s18
    %p22 = pneg %p16
    %p23 = scmp.eq.s32.totalorder %s7, 1
    %p24 = por %p22, %p23
    %p25 = scmp.ne.s32.totalorder %s17, %s20
    %p26 = scmp.eq.s32.totalorder %s7, 0
    %p27 = por %p25, %p26
    %p28 = scmp.ne.s32.totalorder %s17, %s20
    %p29 = scmp.eq.s32.totalorder %s12, 1
    %p30 = por %p28, %p29
    %p31 = scmp.ne.s32.totalorder %s20, %s21
    %p32 = scmp.eq.s32.totalorder %s12, 0
    %p33 = por %p31, %p32
    %p34 = scmp.ne.s32.totalorder %s20, %s21
    %p35 = scmp.eq.s32.totalorder %s13, 1
    %p36 = por %p34, %p35
    %p38 = scmp.ne.s32.totalorder %s21, %s37
    %p39 = scmp.eq.s32.totalorder %s13, 0
    %p40 = por %p38, %p39
    %s41 = ssub.s32 %s7, %s14
    %p42 = scmp.eq.s32.totalorder %s41, 0
    %s44 = sadd.s32 %s43, 1
    %s45 = scalar_select %p42, %s43, %s44
    %p48 = pneg %p42
    %p49 = scmp.eq.s32.totalorder %s7, 1
    %p50 = por %p48, %p49
    %p51 = scmp.ne.s32.totalorder %s43, %s46
    %p52 = scmp.eq.s32.totalorder %s7, 0
    %p53 = por %p51, %p52
    %p54 = scmp.ne.s32.totalorder %s43, %s46
    %p55 = scmp.eq.s32.totalorder %s12, 1
    %p56 = por %p54, %p55
    %p57 = scmp.ne.s32.totalorder %s46, %s47
    %p58 = scmp.eq.s32.totalorder %s12, 0
    %p59 = por %p57, %p58
    %p60 = scmp.ne.s32.totalorder %s46, %s47
    %p61 = scmp.eq.s32.totalorder %s13, 1
    %p62 = por %p60, %p61
    %p64 = scmp.ne.s32.totalorder %s47, %s63
    %p65 = scmp.eq.s32.totalorder %s13, 0
    %p66 = por %p64, %p65
    %p67 = scmp.le.s32.totalorder 1, %s7
    %p68 = scmp.lt.s32.totalorder %s7, 3
    %p69 = pnand %p67, %p68
    %p70 = pneg %p69
    // Predicated region
    $region9: #{multiscale_discriminator_forward.14} parent=5 // pred_check
      _
    $region10: #{multiscale_discriminator_forward.14} parent=5 // pred_check_branch
      %72 = sbr.rel (%p69) target = $region12
    $region11: #{multiscale_discriminator_forward.14} parent=5 // pred_region
      %s73 = ssub.s32 %s7, 1
    $region12: #{multiscale_discriminator_forward.14} parent=5 // pred_fallthru
      _
    %p74 = scmp.lt.s32.totalorder %s7, 2
    // Predicated region
    $region13: #{multiscale_discriminator_forward.14} parent=5 // pred_check
      %p75 = pneg %p74
    $region14: #{multiscale_discriminator_forward.14} parent=5 // pred_check_branch
      %77 = sbr.rel (%p75) target = $region16
    $region15: #{multiscale_discriminator_forward.14} parent=5 // pred_region
      // Predicated region
      $region17: #{multiscale_discriminator_forward.14} parent=15 // pred_check
        %p78 = pneg %p27
      $region18: #{multiscale_discriminator_forward.14} parent=15 // pred_check_branch
        %80 = sbr.rel (%p78) target = $region20
      $region19: #{multiscale_discriminator_forward.14} parent=15 // pred_region
        %p81 = scmp.lt.s32.totalorder %s7, 1
        %s82 = scalar_select %p81, %s7, 1
        %s83 = smul.addr %s82, 2
        %s84 = scalar_lea.vmem %s0, %s83
      $region20: #{multiscale_discriminator_forward.14} parent=15 // pred_fallthru
        _
    $region16: #{multiscale_discriminator_forward.14} parent=5 // pred_fallthru
      _
    %p85 = scmp.le.s32.totalorder 1, %s7
    %p86 = scmp.lt.s32.totalorder %s7, 3
    %p87 = pnand %p85, %p86
    %p88 = pneg %p87
    // Predicated region
    $region21: #{multiscale_discriminator_forward.14} parent=5 // pred_check
      _
    $region22: #{multiscale_discriminator_forward.14} parent=5 // pred_check_branch
      %90 = sbr.rel (%p87) target = $region24
    $region23: #{multiscale_discriminator_forward.14} parent=5 // pred_region
      %s91 = ssub.s32 %s7, 1
      %p92 = scmp.lt.s32.totalorder %s12, 1
      %s93 = scalar_select %p92, %s12, 1
      %s94 = smul.addr %s93, 2
      %s95 = scalar_lea.vmem %s0, %s94
      %p96 = pneg %p33
      %p97 = pneg %p30
      %p98 = pneg %p59
      %p99 = pneg %p56
      %p100 = scmp.lt.s32.totalorder %s12, 1
      %s101 = scalar_select %p100, %s12, 1
      %s102 = smul.addr %s101, 2
      %s103 = scalar_lea.vmem %s1, %s102
      %p104 = scmp.lt.s32.totalorder %s12, 1
      %s105 = scalar_select %p104, %s12, 1
      %s106 = smul.addr %s105, 2
      %s107 = scalar_lea.vmem %s0, %s106
      %p108 = scmp.lt.s32.totalorder %s12, 1
      %s109 = scalar_select %p108, %s12, 1
      %s110 = smul.addr %s109, 2
      %s111 = scalar_lea.vmem %s1, %s110
      %v112 = vld [vmem:[%s107] sm:$0x3]
      %v113 = vunpack.c.l.bf16 %v112
      %vm114 = vcmask 125952
      %v115 = vsel %vm114, %v113, 0.0
      %v116 = vrot.slane %v115, 4
      %v117 = vadd.f32 %v115, %v116
      %v118 = vrot.slane %v117, 2
      %v119 = vadd.f32 %v117, %v118
      %v120 = vrot.slane %v119, 1
      %v121 = vadd.f32 %v119, %v120
      %v122 = vrcp.pop 4.0
      %v123 = vmul.f32 %v121, %v122
      %v124 = vsub.f32 %v113, %v123
      %v125 = vmul.f32 %v124, %v124
      %v126 = vsel %vm114, %v125, 0.0
      %v127 = vrot.slane %v126, 4
      %v128 = vadd.f32 %v126, %v127
      %v129 = vrot.slane %v128, 2
      %v130 = vadd.f32 %v128, %v129
      %v131 = vrot.slane %v130, 1
      %v132 = vadd.f32 %v130, %v131
      %v133 = vmul.f32 %v132, %v122
      %v134 = vadd.f32 %v133, 1e-05
      %v135 = vrsqrt.pop %v134
      %v136 = vmul.f32 %v124, %v135
      %vm137 = vcmp.gt.f32.partialorder %v136, 0.0
      %v138 = vmul.f32 %v136, 0.2
      %v139 = vsel %vm137, %v136, %v138
      %v140 = vpack.c.bf16 %v139, %v139
      %vm141 = vcmask 123904
      %142 = vst.msk [vmem:[%s111] sm:$0x3] %vm141, %v140
      %p143 = scmp.lt.s32.totalorder %s12, 1
      %s144 = scalar_select %p143, %s12, 1
      %s145 = smul.addr %s144, 2
      %s146 = scalar_lea.vmem %s1, %s145
      // Predicated region
      $region25: #{multiscale_discriminator_forward.14} parent=23 // pred_check
        %p147 = pneg %p56
      $region26: #{multiscale_discriminator_forward.14} parent=23 // pred_check_branch
        %149 = sbr.rel (%p147) target = $region28
      $region27: #{multiscale_discriminator_forward.14} parent=23 // pred_region
        _
      $region28: #{multiscale_discriminator_forward.14} parent=23 // pred_fallthru
        _
    $region24: #{multiscale_discriminator_forward.14} parent=5 // pred_fallthru
      _
    %p150 = scmp.le.s32.totalorder 2, %s7
    // Predicated region
    $region29: #{multiscale_discriminator_forward.14} parent=5 // pred_check
      %p151 = pneg %p150
    $region30: #{multiscale_discriminator_forward.14} parent=5 // pred_check_branch
      %153 = sbr.rel (%p151) target = $region32
    $region31: #{multiscale_discriminator_forward.14} parent=5 // pred_region
      %s154 = ssub.s32 %s7, 2
      // Predicated region
      $region33: #{multiscale_discriminator_forward.14} parent=31 // pred_check
        %p155 = pneg %p62
      $region34: #{multiscale_discriminator_forward.14} parent=31 // pred_check_branch
        %157 = sbr.rel (%p155) target = $region36
      $region35: #{multiscale_discriminator_forward.14} parent=31 // pred_region
        %p158 = scmp.lt.s32.totalorder %s13, 1
        %s159 = scalar_select %p158, %s13, 1
        %s160 = smul.addr %s159, 2
        %s161 = scalar_lea.vmem %s1, %s160
      $region36: #{multiscale_discriminator_forward.14} parent=31 // pred_fallthru
        _
    $region32: #{multiscale_discriminator_forward.14} parent=5 // pred_fallthru
      _
  $region6: #{multiscale_discriminator_forward.14} parent=0 // loop_footer
    %s11 = sadd.s32 1, %s7
  $region7: #{multiscale_discriminator_forward.14} parent=0 // loop_footer_branch
    %6 = sbr.rel target = $region3
  $region8: #{multiscale_discriminator_forward.14} parent=0 // loop_exit
    _

// kernel: multiscale_discriminator_forward.15
$region0: #{multiscale_discriminator_forward.15}
  #allocation0 [shape = 'u32[]', space=smem, size = 0x4, offset = 0x4, fixed_abs, tag = 'smem constant byte address 0x4 - core index']
  #allocation1 [shape = 'u32[144,128]{1,0:T(1,128)}', space=vmem, size = 0x12000, scoped, tag = 'internal scratch']
  %s0 = inlined_call_operand.vmem [shape: bf16[32,256], index: 0, kind: input, shape index: {}]
  %s1 = inlined_call_operand.vmem [shape: bf16[256,128], index: 1, kind: input, shape index: {}]
  %s2 = inlined_call_operand.vmem [shape: f32[1,128], index: 2, kind: input, shape index: {}]
  %s3 = inlined_call_operand.vmem [shape: f32[32,128], index: 3, kind: output, shape index: {}]
  %s4 = sld [smem:[#allocation0]]
  $region22: #{multiscale_discriminator_forward.15} parent=0
    _
  %s6 = ssub.s32 1, %s4
  %s7 = scalar_select 0, %s6, %s4
  // Predicated region
  $region2: #{multiscale_discriminator_forward.15} parent=0 // pred_check
    _
  $region3: #{multiscale_discriminator_forward.15} parent=0 // pred_check_branch
    %9 = sbr.rel (0) target = $region5
  $region4: #{multiscale_discriminator_forward.15} parent=0 // pred_region
    _
  $region5: #{multiscale_discriminator_forward.15} parent=0 // pred_fallthru
    _
  // Predicated region
  $region6: #{multiscale_discriminator_forward.15} parent=0 // pred_check
    _
  $region7: #{multiscale_discriminator_forward.15} parent=0 // pred_check_branch
    %11 = sbr.rel (0) target = $region9
  $region8: #{multiscale_discriminator_forward.15} parent=0 // pred_region
    _
  $region9: #{multiscale_discriminator_forward.15} parent=0 // pred_fallthru
    _
  // Predicated region
  $region10: #{multiscale_discriminator_forward.15} parent=0 // pred_check
    _
  $region11: #{multiscale_discriminator_forward.15} parent=0 // pred_check_branch
    %13 = sbr.rel (0) target = $region13
  $region12: #{multiscale_discriminator_forward.15} parent=0 // pred_region
    _
  $region13: #{multiscale_discriminator_forward.15} parent=0 // pred_fallthru
    _
  %v15 = vld [vmem:[%s0] sm:$0xff]
  %v16 = vld [vmem:[%s0 + $0x8] sm:$0xff]
  %v17 = vld [vmem:[%s0 + $0x10] sm:$0xff]
  %v18 = vld [vmem:[%s0 + $0x18] sm:$0xff]
  %v19 = vld [vmem:[%s1] sm:$0xf]
  %v20 = vld [vmem:[%s1 + $0x4] sm:$0xf]
  %v21 = vld [vmem:[%s1 + $0x8] sm:$0xf]
  %v22 = vld [vmem:[%s1 + $0xc] sm:$0xf]
  %v23 = vld [vmem:[%s1 + $0x10] sm:$0xf]
  %v24 = vld [vmem:[%s1 + $0x14] sm:$0xf]
  %v25 = vld [vmem:[%s1 + $0x18] sm:$0xf]
  %v26 = vld [vmem:[%s1 + $0x1c] sm:$0xf]
  %v27 = vld [vmem:[%s1 + $0x20] sm:$0xf]
  %v28 = vld [vmem:[%s1 + $0x24] sm:$0xf]
  %v29 = vld [vmem:[%s1 + $0x28] sm:$0xf]
  %v30 = vld [vmem:[%s1 + $0x2c] sm:$0xf]
  %v31 = vld [vmem:[%s1 + $0x30] sm:$0xf]
  %v32 = vld [vmem:[%s1 + $0x34] sm:$0xf]
  %v33 = vld [vmem:[%s1 + $0x38] sm:$0xf]
  %v34 = vld [vmem:[%s1 + $0x3c] sm:$0xf]
  %v35 = vld [vmem:[%s1 + $0x40] sm:$0xf]
  %v36 = vld [vmem:[%s1 + $0x44] sm:$0xf]
  %v37 = vld [vmem:[%s1 + $0x48] sm:$0xf]
  %v38 = vld [vmem:[%s1 + $0x4c] sm:$0xf]
  %v39 = vld [vmem:[%s1 + $0x50] sm:$0xf]
  %v40 = vld [vmem:[%s1 + $0x54] sm:$0xf]
  %v41 = vld [vmem:[%s1 + $0x58] sm:$0xf]
  %v42 = vld [vmem:[%s1 + $0x5c] sm:$0xf]
  %v43 = vld [vmem:[%s1 + $0x60] sm:$0xf]
  %v44 = vld [vmem:[%s1 + $0x64] sm:$0xf]
  %v45 = vld [vmem:[%s1 + $0x68] sm:$0xf]
  %v46 = vld [vmem:[%s1 + $0x6c] sm:$0xf]
  %v47 = vld [vmem:[%s1 + $0x70] sm:$0xf]
  %v48 = vld [vmem:[%s1 + $0x74] sm:$0xf]
  %v49 = vld [vmem:[%s1 + $0x78] sm:$0xf]
  %v50 = vld [vmem:[%s1 + $0x7c] sm:$0xf]
  %v51 = vld [vmem:[%s2] sm:$0x1]
  %v53 = vlaneseq
  %v54 = vshrl.u32 %v53, 7
  %v55 = vsub.s32 0, %v54
  %v56 = vrot.slane %v51, %v55
  %v62 = vunpack.c.l.b16 %v15
  %v63 = vunpack.c.h.b16 %v15
  %v64 = vunpack.c.l.b16 %v16
  %v65 = vunpack.c.h.b16 %v16
  %v66 = vunpack.c.l.b16 %v17
  %v67 = vunpack.c.h.b16 %v17
  %v68 = vunpack.c.l.b16 %v18
  %v69 = vunpack.c.h.b16 %v18
  %v70 = vpack.c.b16 %v64, %v62
  %v71 = vpack.c.b16 %v65, %v63
  %v72 = vpack.c.b16 %v68, %v66
  %v73 = vpack.c.b16 %v69, %v67
  %v110 = vunpack.c.l.b16 %v19
  %v111 = vunpack.c.l.b16 %v20
  %v112 = vunpack.c.l.b16 %v21
  %v113 = vunpack.c.l.b16 %v22
  %v114 = vunpack.c.l.b16 %v23
  %v115 = vunpack.c.l.b16 %v24
  %v116 = vunpack.c.l.b16 %v25
  %v117 = vunpack.c.l.b16 %v26
  %v118 = vunpack.c.l.b16 %v27
  %v119 = vunpack.c.l.b16 %v28
  %v120 = vunpack.c.l.b16 %v29
  %v121 = vunpack.c.l.b16 %v30
  %v122 = vunpack.c.l.b16 %v31
  %v123 = vunpack.c.l.b16 %v32
  %v124 = vunpack.c.l.b16 %v33
  %v125 = vunpack.c.l.b16 %v34
  %v126 = vunpack.c.l.b16 %v35
  %v127 = vunpack.c.l.b16 %v36
  %v128 = vunpack.c.l.b16 %v37
  %v129 = vunpack.c.l.b16 %v38
  %v130 = vunpack.c.l.b16 %v39
  %v131 = vunpack.c.l.b16 %v40
  %v132 = vunpack.c.l.b16 %v41
  %v133 = vunpack.c.l.b16 %v42
  %v134 = vunpack.c.l.b16 %v43
  %v135 = vunpack.c.l.b16 %v44
  %v136 = vunpack.c.l.b16 %v45
  %v137 = vunpack.c.l.b16 %v46
  %v138 = vunpack.c.l.b16 %v47
  %v139 = vunpack.c.l.b16 %v48
  %v140 = vunpack.c.l.b16 %v49
  %v141 = vunpack.c.l.b16 %v50
  %v142 = vpack.c.b16 %v111, %v110
  %v143 = vpack.c.b16 %v113, %v112
  %v144 = vpack.c.b16 %v115, %v114
  %v145 = vpack.c.b16 %v117, %v116
  %v146 = vpack.c.b16 %v119, %v118
  %v147 = vpack.c.b16 %v121, %v120
  %v148 = vpack.c.b16 %v123, %v122
  %v149 = vpack.c.b16 %v125, %v124
  %v150 = vpack.c.b16 %v127, %v126
  %v151 = vpack.c.b16 %v129, %v128
  %v152 = vpack.c.b16 %v131, %v130
  %v153 = vpack.c.b16 %v133, %v132
  %v154 = vpack.c.b16 %v135, %v134
  %v155 = vpack.c.b16 %v137, %v136
  %v156 = vpack.c.b16 %v139, %v138
  %v157 = vpack.c.b16 %v141, %v140
  %174 = vmatprep.subr.bf16.mxu0 0
  %175 = vmatpush1.bf16.msra.mxu0 %v142
  %176 = vmatprep.subr.bf16.mxu0 0
  %177 = vmatpush1.bf16.msra.mxu0 %v143
  %178 = vmatprep.subr.bf16.mxu0 0
  %179 = vmatpush1.bf16.msra.mxu0 %v144
  %180 = vmatprep.subr.bf16.mxu0 0
  %181 = vmatpush1.bf16.msra.mxu0 %v145
  %182 = vmatprep.subr.bf16.mxu0 0
  %183 = vmatpush1.bf16.msra.mxu0 %v146
  %184 = vmatprep.subr.bf16.mxu0 0
  %185 = vmatpush1.bf16.msra.mxu0 %v147
  %186 = vmatprep.subr.bf16.mxu0 0
  %187 = vmatpush1.bf16.msra.mxu0 %v148
  %188 = vmatprep.subr.bf16.mxu0 0
  %189 = vmatpush1.bf16.msra.mxu0 %v149
  %190 = vmatprep.subr.bf16.mxu0 0
  %191 = vmatpush1.bf16.msra.mxu0 %v150
  %192 = vmatprep.subr.bf16.mxu0 0
  %193 = vmatpush1.bf16.msra.mxu0 %v151
  %194 = vmatprep.subr.bf16.mxu0 0
  %195 = vmatpush1.bf16.msra.mxu0 %v152
  %196 = vmatprep.subr.bf16.mxu0 0
  %197 = vmatpush1.bf16.msra.mxu0 %v153
  %198 = vmatprep.subr.bf16.mxu0 0
  %199 = vmatpush1.bf16.msra.mxu0 %v154
  %200 = vmatprep.subr.bf16.mxu0 0
  %201 = vmatpush1.bf16.msra.mxu0 %v155
  %202 = vmatprep.subr.bf16.mxu0 0
  %203 = vmatpush1.bf16.msra.mxu0 %v156
  %204 = vmatprep.subr.bf16.mxu0 0
  %205 = vmatpush1.bf16.msra.mxu0 %v157
  %206 = vmatprep.mubr.bf16.mxu0 %v71
  %207 = vmatmul.mubr.bf16.gmra.mrb[0].mxu0 %v70
  %v208 = vpop.f32.mrb[0].mxu0
  %v209 = vadd.f32 %v56, %v208
  %v210 = vpop.f32.mrb[0].mxu0
  %v211 = vpop.f32.mrb[0].mxu0
  %v212 = vadd.f32 %v56, %v211
  %v213 = vpop.f32.mrb[0].mxu0
  %214 = vmatprep.mubr.bf16.mxu0 %v73
  %215 = vmatmul.mubr.bf16.gmra.mrb[0].mxu0 %v72
  %v216 = vpop.f32.mrb[0].mxu0
  %v217 = vadd.f32 %v56, %v216
  %v218 = vpop.f32.mrb[0].mxu0
  %v219 = vpop.f32.mrb[0].mxu0
  %v220 = vadd.f32 %v56, %v219
  %v221 = vpop.f32.mrb[0].mxu0
  %222 = vdwg.mxu0
  %223 = vst [vmem:[%s3] sm:$0xff] %v209
  %224 = vst [vmem:[%s3 + $0x8] sm:$0xff] %v212
  %225 = vst [vmem:[%s3 + $0x10] sm:$0xff] %v217
  %226 = vst [vmem:[%s3 + $0x18] sm:$0xff] %v220
  // Predicated region
  $region14: #{multiscale_discriminator_forward.15} parent=0 // pred_check
    _
  $region15: #{multiscale_discriminator_forward.15} parent=0 // pred_check_branch
    %228 = sbr.rel (0) target = $region17
  $region16: #{multiscale_discriminator_forward.15} parent=0 // pred_region
    _
  $region17: #{multiscale_discriminator_forward.15} parent=0 // pred_fallthru
    _
  // Predicated region
  $region18: #{multiscale_discriminator_forward.15} parent=0 // pred_check
    _
  $region19: #{multiscale_discriminator_forward.15} parent=0 // pred_check_branch
    %230 = sbr.rel (0) target = $region21
  $region20: #{multiscale_discriminator_forward.15} parent=0 // pred_region
    _
  $region21: #{multiscale_discriminator_forward.15} parent=0 // pred_fallthru
    _

// kernel: multiscale_discriminator_forward.8
$region0: #{multiscale_discriminator_forward.8}
  #allocation0 [shape = 'u32[]', space=smem, size = 0x4, offset = 0x4, fixed_abs, tag = 'smem constant byte address 0x4 - core index']
  #allocation1 [shape = 'u32[144,128]{1,0:T(1,128)}', space=vmem, size = 0x12000, scoped, tag = 'internal scratch']
  %s0 = inlined_call_operand.vmem [shape: bf16[128,128], index: 0, kind: input, shape index: {}]
  %s1 = inlined_call_operand.vmem [shape: bf16[128,128], index: 1, kind: input, shape index: {}]
  %s2 = inlined_call_operand.vmem [shape: f32[1,128], index: 2, kind: input, shape index: {}]
  %s3 = inlined_call_operand.vmem [shape: bf16[128,128], index: 3, kind: output, shape index: {}]
  %s4 = sld [smem:[#allocation0]]
  $region22: #{multiscale_discriminator_forward.8} parent=0
    _
  %s6 = ssub.s32 1, %s4
  %s7 = scalar_select 0, %s6, %s4
  // Predicated region
  $region2: #{multiscale_discriminator_forward.8} parent=0 // pred_check
    _
  $region3: #{multiscale_discriminator_forward.8} parent=0 // pred_check_branch
    %9 = sbr.rel (0) target = $region5
  $region4: #{multiscale_discriminator_forward.8} parent=0 // pred_region
    _
  $region5: #{multiscale_discriminator_forward.8} parent=0 // pred_fallthru
    _
  // Predicated region
  $region6: #{multiscale_discriminator_forward.8} parent=0 // pred_check
    _
  $region7: #{multiscale_discriminator_forward.8} parent=0 // pred_check_branch
    %11 = sbr.rel (0) target = $region9
  $region8: #{multiscale_discriminator_forward.8} parent=0 // pred_region
    _
  $region9: #{multiscale_discriminator_forward.8} parent=0 // pred_fallthru
    _
  // Predicated region
  $region10: #{multiscale_discriminator_forward.8} parent=0 // pred_check
    _
  $region11: #{multiscale_discriminator_forward.8} parent=0 // pred_check_branch
    %13 = sbr.rel (0) target = $region13
  $region12: #{multiscale_discriminator_forward.8} parent=0 // pred_region
    _
  $region13: #{multiscale_discriminator_forward.8} parent=0 // pred_fallthru
    _
  %v15 = vld [vmem:[%s0] sm:$0xf]
  %v16 = vld [vmem:[%s0 + $0x4] sm:$0xf]
  %v17 = vld [vmem:[%s0 + $0x8] sm:$0xf]
  %v18 = vld [vmem:[%s0 + $0xc] sm:$0xf]
  %v19 = vld [vmem:[%s0 + $0x10] sm:$0xf]
  %v20 = vld [vmem:[%s0 + $0x14] sm:$0xf]
  %v21 = vld [vmem:[%s0 + $0x18] sm:$0xf]
  %v22 = vld [vmem:[%s0 + $0x1c] sm:$0xf]
  %v23 = vld [vmem:[%s0 + $0x20] sm:$0xf]
  %v24 = vld [vmem:[%s0 + $0x24] sm:$0xf]
  %v25 = vld [vmem:[%s0 + $0x28] sm:$0xf]
  %v26 = vld [vmem:[%s0 + $0x2c] sm:$0xf]
  %v27 = vld [vmem:[%s0 + $0x30] sm:$0xf]
  %v28 = vld [vmem:[%s0 + $0x34] sm:$0xf]
  %v29 = vld [vmem:[%s0 + $0x38] sm:$0xf]
  %v30 = vld [vmem:[%s0 + $0x3c] sm:$0xf]
  %v31 = vld [vmem:[%s1] sm:$0xf]
  %v32 = vld [vmem:[%s1 + $0x4] sm:$0xf]
  %v33 = vld [vmem:[%s1 + $0x8] sm:$0xf]
  %v34 = vld [vmem:[%s1 + $0xc] sm:$0xf]
  %v35 = vld [vmem:[%s1 + $0x10] sm:$0xf]
  %v36 = vld [vmem:[%s1 + $0x14] sm:$0xf]
  %v37 = vld [vmem:[%s1 + $0x18] sm:$0xf]
  %v38 = vld [vmem:[%s1 + $0x1c] sm:$0xf]
  %v39 = vld [vmem:[%s1 + $0x20] sm:$0xf]
  %v40 = vld [vmem:[%s1 + $0x24] sm:$0xf]
  %v41 = vld [vmem:[%s1 + $0x28] sm:$0xf]
  %v42 = vld [vmem:[%s1 + $0x2c] sm:$0xf]
  %v43 = vld [vmem:[%s1 + $0x30] sm:$0xf]
  %v44 = vld [vmem:[%s1 + $0x34] sm:$0xf]
  %v45 = vld [vmem:[%s1 + $0x38] sm:$0xf]
  %v46 = vld [vmem:[%s1 + $0x3c] sm:$0xf]
  %v47 = vld [vmem:[%s2] sm:$0x1]
  %v49 = vlaneseq
  %v50 = vshrl.u32 %v49, 7
  %v51 = vsub.s32 0, %v50
  %v52 = vrot.slane %v47, %v51
  %v70 = vunpack.c.l.b16 %v15
  %v71 = vunpack.c.l.b16 %v16
  %v72 = vunpack.c.l.b16 %v17
  %v73 = vunpack.c.l.b16 %v18
  %v74 = vunpack.c.l.b16 %v19
  %v75 = vunpack.c.l.b16 %v20
  %v76 = vunpack.c.l.b16 %v21
  %v77 = vunpack.c.l.b16 %v22
  %v78 = vunpack.c.l.b16 %v23
  %v79 = vunpack.c.l.b16 %v24
  %v80 = vunpack.c.l.b16 %v25
  %v81 = vunpack.c.l.b16 %v26
  %v82 = vunpack.c.l.b16 %v27
  %v83 = vunpack.c.l.b16 %v28
  %v84 = vunpack.c.l.b16 %v29
  %v85 = vunpack.c.l.b16 %v30
  %v86 = vpack.c.b16 %v71, %v70
  %v87 = vpack.c.b16 %v73, %v72
  %v88 = vpack.c.b16 %v75, %v74
  %v89 = vpack.c.b16 %v77, %v76
  %v90 = vpack.c.b16 %v79, %v78
  %v91 = vpack.c.b16 %v81, %v80
  %v92 = vpack.c.b16 %v83, %v82
  %v93 = vpack.c.b16 %v85, %v84
  %v118 = vunpack.c.l.b16 %v31
  %v119 = vunpack.c.l.b16 %v32
  %v120 = vunpack.c.l.b16 %v33
  %v121 = vunpack.c.l.b16 %v34
  %v122 = vunpack.c.l.b16 %v35
  %v123 = vunpack.c.l.b16 %v36
  %v124 = vunpack.c.l.b16 %v37
  %v125 = vunpack.c.l.b16 %v38
  %v126 = vunpack.c.l.b16 %v39
  %v127 = vunpack.c.l.b16 %v40
  %v128 = vunpack.c.l.b16 %v41
  %v129 = vunpack.c.l.b16 %v42
  %v130 = vunpack.c.l.b16 %v43
  %v131 = vunpack.c.l.b16 %v44
  %v132 = vunpack.c.l.b16 %v45
  %v133 = vunpack.c.l.b16 %v46
  %v134 = vpack.c.b16 %v119, %v118
  %v135 = vpack.c.b16 %v121, %v120
  %v136 = vpack.c.b16 %v123, %v122
  %v137 = vpack.c.b16 %v125, %v124
  %v138 = vpack.c.b16 %v127, %v126
  %v139 = vpack.c.b16 %v129, %v128
  %v140 = vpack.c.b16 %v131, %v130
  %v141 = vpack.c.b16 %v133, %v132
  %150 = vmatprep.subr.bf16.mxu0 0
  %151 = vmatpush1.bf16.msra.mxu0 %v134
  %152 = vmatprep.subr.bf16.mxu0 0
  %153 = vmatpush1.bf16.msra.mxu0 %v135
  %154 = vmatprep.subr.bf16.mxu0 0
  %155 = vmatpush1.bf16.msra.mxu0 %v136
  %156 = vmatprep.subr.bf16.mxu0 0
  %157 = vmatpush1.bf16.msra.mxu0 %v137
  %158 = vmatprep.subr.bf16.mxu0 0
  %159 = vmatpush1.bf16.msra.mxu0 %v138
  %160 = vmatprep.subr.bf16.mxu0 0
  %161 = vmatpush1.bf16.msra.mxu0 %v139
  %162 = vmatprep.subr.bf16.mxu0 0
  %163 = vmatpush1.bf16.msra.mxu0 %v140
  %164 = vmatprep.subr.bf16.mxu0 0
  %165 = vmatpush1.bf16.msra.mxu0 %v141
  %166 = vmatprep.subr.bf16.mxu0 0
  %167 = vmatpush1.bf16.msra.mxu0 0
  %168 = vmatprep.subr.bf16.mxu0 0
  %169 = vmatpush1.bf16.msra.mxu0 0
  %170 = vmatprep.subr.bf16.mxu0 0
  %171 = vmatpush1.bf16.msra.mxu0 0
  %172 = vmatprep.subr.bf16.mxu0 0
  %173 = vmatpush1.bf16.msra.mxu0 0
  %174 = vmatprep.subr.bf16.mxu0 0
  %175 = vmatpush1.bf16.msra.mxu0 0
  %176 = vmatprep.subr.bf16.mxu0 0
  %177 = vmatpush1.bf16.msra.mxu0 0
  %178 = vmatprep.subr.bf16.mxu0 0
  %179 = vmatpush1.bf16.msra.mxu0 0
  %180 = vmatprep.subr.bf16.mxu0 0
  %181 = vmatpush1.bf16.msra.mxu0 0
  %182 = vmatprep.mubr.bf16.mxu0 0
  %183 = vmatmul.mubr.bf16.gmra.mrb[0].mxu0 %v86
  %v184 = vpop.f32.mrb[0].mxu0
  %v185 = vadd.f32 %v52, %v184
  %v186 = vpop.f32.mrb[0].mxu0
  %v187 = vpop.f32.mrb[0].mxu0
  %v188 = vadd.f32 %v52, %v187
  %v189 = vpop.f32.mrb[0].mxu0
  %190 = vmatprep.mubr.bf16.mxu0 0
  %191 = vmatmul.mubr.bf16.gmra.mrb[0].mxu0 %v87
  %v192 = vpop.f32.mrb[0].mxu0
  %v193 = vadd.f32 %v52, %v192
  %v194 = vpop.f32.mrb[0].mxu0
  %v195 = vpop.f32.mrb[0].mxu0
  %v196 = vadd.f32 %v52, %v195
  %v197 = vpop.f32.mrb[0].mxu0
  %198 = vmatprep.mubr.bf16.mxu0 0
  %199 = vmatmul.mubr.bf16.gmra.mrb[0].mxu0 %v88
  %v200 = vpop.f32.mrb[0].mxu0
  %v201 = vadd.f32 %v52, %v200
  %v202 = vpop.f32.mrb[0].mxu0
  %v203 = vpop.f32.mrb[0].mxu0
  %v204 = vadd.f32 %v52, %v203
  %v205 = vpop.f32.mrb[0].mxu0
  %206 = vmatprep.mubr.bf16.mxu0 0
  %207 = vmatmul.mubr.bf16.gmra.mrb[0].mxu0 %v89
  %v208 = vpop.f32.mrb[0].mxu0
  %v209 = vadd.f32 %v52, %v208
  %v210 = vpop.f32.mrb[0].mxu0
  %v211 = vpop.f32.mrb[0].mxu0
  %v212 = vadd.f32 %v52, %v211
  %v213 = vpop.f32.mrb[0].mxu0
  %214 = vmatprep.mubr.bf16.mxu0 0
  %215 = vmatmul.mubr.bf16.gmra.mrb[0].mxu0 %v90
  %v216 = vpop.f32.mrb[0].mxu0
  %v217 = vadd.f32 %v52, %v216
  %v218 = vpop.f32.mrb[0].mxu0
  %v219 = vpop.f32.mrb[0].mxu0
  %v220 = vadd.f32 %v52, %v219
  %v221 = vpop.f32.mrb[0].mxu0
  %222 = vmatprep.mubr.bf16.mxu0 0
  %223 = vmatmul.mubr.bf16.gmra.mrb[0].mxu0 %v91
  %v224 = vpop.f32.mrb[0].mxu0
  %v225 = vadd.f32 %v52, %v224
  %v226 = vpop.f32.mrb[0].mxu0
  %v227 = vpop.f32.mrb[0].mxu0
  %v228 = vadd.f32 %v52, %v227
  %v229 = vpop.f32.mrb[0].mxu0
  %230 = vmatprep.mubr.bf16.mxu0 0
  %231 = vmatmul.mubr.bf16.gmra.mrb[0].mxu0 %v92
  %v232 = vpop.f32.mrb[0].mxu0
  %v233 = vadd.f32 %v52, %v232
  %v234 = vpop.f32.mrb[0].mxu0
  %v235 = vpop.f32.mrb[0].mxu0
  %v236 = vadd.f32 %v52, %v235
  %v237 = vpop.f32.mrb[0].mxu0
  %238 = vmatprep.mubr.bf16.mxu0 0
  %239 = vmatmul.mubr.bf16.gmra.mrb[0].mxu0 %v93
  %v240 = vpop.f32.mrb[0].mxu0
  %v241 = vadd.f32 %v52, %v240
  %v242 = vpop.f32.mrb[0].mxu0
  %v243 = vpop.f32.mrb[0].mxu0
  %v244 = vadd.f32 %v52, %v243
  %v245 = vpop.f32.mrb[0].mxu0
  %246 = vdwg.mxu0
  %vm247 = vcmp.gt.f32.partialorder %v185, 0.0
  %vm248 = vcmp.gt.f32.partialorder %v188, 0.0
  %vm249 = vcmp.gt.f32.partialorder %v193, 0.0
  %vm250 = vcmp.gt.f32.partialorder %v196, 0.0
  %vm251 = vcmp.gt.f32.partialorder %v201, 0.0
  %vm252 = vcmp.gt.f32.partialorder %v204, 0.0
  %vm253 = vcmp.gt.f32.partialorder %v209, 0.0
  %vm254 = vcmp.gt.f32.partialorder %v212, 0.0
  %vm255 = vcmp.gt.f32.partialorder %v217, 0.0
  %vm256 = vcmp.gt.f32.partialorder %v220, 0.0
  %vm257 = vcmp.gt.f32.partialorder %v225, 0.0
  %vm258 = vcmp.gt.f32.partialorder %v228, 0.0
  %vm259 = vcmp.gt.f32.partialorder %v233, 0.0
  %vm260 = vcmp.gt.f32.partialorder %v236, 0.0
  %vm261 = vcmp.gt.f32.partialorder %v241, 0.0
  %vm262 = vcmp.gt.f32.partialorder %v244, 0.0
  %v263 = vmul.f32 %v185, 0.2
  %v264 = vmul.f32 %v188, 0.2
  %v265 = vmul.f32 %v193, 0.2
  %v266 = vmul.f32 %v196, 0.2
  %v267 = vmul.f32 %v201, 0.2
  %v268 = vmul.f32 %v204, 0.2
  %v269 = vmul.f32 %v209, 0.2
  %v270 = vmul.f32 %v212, 0.2
  %v271 = vmul.f32 %v217, 0.2
  %v272 = vmul.f32 %v220, 0.2
  %v273 = vmul.f32 %v225, 0.2
  %v274 = vmul.f32 %v228, 0.2
  %v275 = vmul.f32 %v233, 0.2
  %v276 = vmul.f32 %v236, 0.2
  %v277 = vmul.f32 %v241, 0.2
  %v278 = vmul.f32 %v244, 0.2
  %v279 = vsel %vm247, %v185, %v263
  %v280 = vsel %vm248, %v188, %v264
  %v281 = vsel %vm249, %v193, %v265
  %v282 = vsel %vm250, %v196, %v266
  %v283 = vsel %vm251, %v201, %v267
  %v284 = vsel %vm252, %v204, %v268
  %v285 = vsel %vm253, %v209, %v269
  %v286 = vsel %vm254, %v212, %v270
  %v287 = vsel %vm255, %v217, %v271
  %v288 = vsel %vm256, %v220, %v272
  %v289 = vsel %vm257, %v225, %v273
  %v290 = vsel %vm258, %v228, %v274
  %v291 = vsel %vm259, %v233, %v275
  %v292 = vsel %vm260, %v236, %v276
  %v293 = vsel %vm261, %v241, %v277
  %v294 = vsel %vm262, %v244, %v278
  %v295 = vpack.c.bf16 %v280, %v279
  %v296 = vpack.c.bf16 %v282, %v281
  %v297 = vpack.c.bf16 %v284, %v283
  %v298 = vpack.c.bf16 %v286, %v285
  %v299 = vpack.c.bf16 %v288, %v287
  %v300 = vpack.c.bf16 %v290, %v289
  %v301 = vpack.c.bf16 %v292, %v291
  %v302 = vpack.c.bf16 %v294, %v293
  %v311 = vunpack.c.l.b16 %v295
  %v312 = vunpack.c.h.b16 %v295
  %v313 = vunpack.c.l.b16 %v296
  %v314 = vunpack.c.h.b16 %v296
  %v315 = vunpack.c.l.b16 %v297
  %v316 = vunpack.c.h.b16 %v297
  %v317 = vunpack.c.l.b16 %v298
  %v318 = vunpack.c.h.b16 %v298
  %v319 = vunpack.c.l.b16 %v299
  %v320 = vunpack.c.h.b16 %v299
  %v321 = vunpack.c.l.b16 %v300
  %v322 = vunpack.c.h.b16 %v300
  %v323 = vunpack.c.l.b16 %v301
  %v324 = vunpack.c.h.b16 %v301
  %v325 = vunpack.c.l.b16 %v302
  %v326 = vunpack.c.h.b16 %v302
  %v327 = vpack.c.b16 %v311, %v311
  %v328 = vpack.c.b16 %v312, %v312
  %v329 = vpack.c.b16 %v313, %v313
  %v330 = vpack.c.b16 %v314, %v314
  %v331 = vpack.c.b16 %v315, %v315
  %v332 = vpack.c.b16 %v316, %v316
  %v333 = vpack.c.b16 %v317, %v317
  %v334 = vpack.c.b16 %v318, %v318
  %v335 = vpack.c.b16 %v319, %v319
  %v336 = vpack.c.b16 %v320, %v320
  %v337 = vpack.c.b16 %v321, %v321
  %v338 = vpack.c.b16 %v322, %v322
  %v339 = vpack.c.b16 %v323, %v323
  %v340 = vpack.c.b16 %v324, %v324
  %v341 = vpack.c.b16 %v325, %v325
  %v342 = vpack.c.b16 %v326, %v326
  %359 = vst [vmem:[%s3] sm:$0xf] %v327
  %360 = vst [vmem:[%s3 + $0x4] sm:$0xf] %v328
  %361 = vst [vmem:[%s3 + $0x8] sm:$0xf] %v329
  %362 = vst [vmem:[%s3 + $0xc] sm:$0xf] %v330
  %363 = vst [vmem:[%s3 + $0x10] sm:$0xf] %v331
  %364 = vst [vmem:[%s3 + $0x14] sm:$0xf] %v332
  %365 = vst [vmem:[%s3 + $0x18] sm:$0xf] %v333
  %366 = vst [vmem:[%s3 + $0x1c] sm:$0xf] %v334
  %367 = vst [vmem:[%s3 + $0x20] sm:$0xf] %v335
  %368 = vst [vmem:[%s3 + $0x24] sm:$0xf] %v336
  %369 = vst [vmem:[%s3 + $0x28] sm:$0xf] %v337
  %370 = vst [vmem:[%s3 + $0x2c] sm:$0xf] %v338
  %371 = vst [vmem:[%s3 + $0x30] sm:$0xf] %v339
  %372 = vst [vmem:[%s3 + $0x34] sm:$0xf] %v340
  %373 = vst [vmem:[%s3 + $0x38] sm:$0xf] %v341
  %374 = vst [vmem:[%s3 + $0x3c] sm:$0xf] %v342
  // Predicated region
  $region14: #{multiscale_discriminator_forward.8} parent=0 // pred_check
    _
  $region15: #{multiscale_discriminator_forward.8} parent=0 // pred_check_branch
    %376 = sbr.rel (0) target = $region17
  $region16: #{multiscale_discriminator_forward.8} parent=0 // pred_region
    _
  $region17: #{multiscale_discriminator_forward.8} parent=0 // pred_fallthru
    _
  // Predicated region
  $region18: #{multiscale_discriminator_forward.8} parent=0 // pred_check
    _
  $region19: #{multiscale_discriminator_forward.8} parent=0 // pred_check_branch
    %378 = sbr.rel (0) target = $region21
  $region20: #{multiscale_discriminator_forward.8} parent=0 // pred_region
    _
  $region21: #{multiscale_discriminator_forward.8} parent=0 // pred_fallthru
    _

// kernel: multiscale_discriminator_forward.9
$region0: #{multiscale_discriminator_forward.9}
  #allocation0 [shape = 'u32[]', space=smem, size = 0x4, offset = 0x4, fixed_abs, tag = 'smem constant byte address 0x4 - core index']
  #allocation1 [shape = 'u32[144,128]{1,0:T(1,128)}', space=vmem, size = 0x12000, scoped, tag = 'internal scratch']
  %s0 = inlined_call_operand.vmem [shape: bf16[32,128], index: 0, kind: input, shape index: {}]
  %s1 = inlined_call_operand.vmem [shape: bf16[128,128], index: 1, kind: input, shape index: {}]
  %s2 = inlined_call_operand.vmem [shape: f32[1,128], index: 2, kind: input, shape index: {}]
  %s3 = inlined_call_operand.vmem [shape: bf16[32,128], index: 3, kind: output, shape index: {}]
  %s4 = sld [smem:[#allocation0]]
  $region45: #{multiscale_discriminator_forward.9} parent=0
    _
  %s6 = ssub.s32 1, %s4
  %s7 = scalar_select 0, %s6, %s4
  loop: start=0, step=1, limit=4
  $region2: #{multiscale_discriminator_forward.9} parent=0 // loop_pre_header
    _
  $region3: #{multiscale_discriminator_forward.9} parent=0 // loop_header
    %s9 = sphi 0, %s13
    %p10 = scmp.ge.s32.totalorder %s9, 4
    %s16 = sphi 0, %s28
    %s17 = sphi 0, %s24
    %s18 = sphi 0, %s16
    %s19 = sphi 0, %s17
    %s20 = sphi 0, %s18
    %s21 = sphi 0, %s19
    %s31 = sphi 0, %s33
    %s34 = sphi 0, %s31
    %s35 = sphi 0, %s34
    %s51 = sphi 0, %s35
    %s57 = sphi 0, %s59
    %s60 = sphi 0, %s57
    %s61 = sphi 0, %s60
    %s77 = sphi 0, %s61
    %s83 = sphi 0, %s85
    %s86 = sphi 0, %s83
    %s87 = sphi 0, %s86
    %s103 = sphi 0, %s87
    %s111 = sphi 0, %s113
    %s114 = sphi 0, %s111
    %s115 = sphi 0, %s114
    %s131 = sphi 0, %s115
  $region4: #{multiscale_discriminator_forward.9} parent=0 // loop_header_branch
    %12 = sbr.rel (%p10) target = $region8
  $region5: #{multiscale_discriminator_forward.9} parent=0 // loop_body
    %s14 = ssub.s32 %s9, 1
    %s15 = ssub.s32 %s9, 2
    %s22 = sadd.s32 1, %s17
    %p23 = scmp.ge.s32.totalorder %s22, 2
    %s24 = scalar_select %p23, 0, %s22
    %s25 = sadd.s32 1, %s16
    %s26 = scalar_select %p23, %s25, %s16
    %p27 = scmp.ge.s32.totalorder %s26, 1
    %s28 = scalar_select %p27, 0, %s26
    %s29 = ssub.s32 %s17, %s24
    %p30 = scmp.eq.s32.totalorder %s29, 0
    %s32 = sadd.s32 %s31, 1
    %s33 = scalar_select %p30, %s31, %s32
    %p36 = pneg %p30
    %p37 = scmp.eq.s32.totalorder %s9, 1
    %p38 = por %p36, %p37
    %p39 = scmp.ne.s32.totalorder %s31, %s34
    %p40 = scmp.eq.s32.totalorder %s9, 0
    %p41 = por %p39, %p40
    %p42 = scmp.ne.s32.totalorder %s31, %s34
    %p43 = scmp.eq.s32.totalorder %s14, 1
    %p44 = por %p42, %p43
    %p45 = scmp.ne.s32.totalorder %s34, %s35
    %p46 = scmp.eq.s32.totalorder %s14, 0
    %p47 = por %p45, %p46
    %p48 = scmp.ne.s32.totalorder %s34, %s35
    %p49 = scmp.eq.s32.totalorder %s15, 1
    %p50 = por %p48, %p49
    %p52 = scmp.ne.s32.totalorder %s35, %s51
    %p53 = scmp.eq.s32.totalorder %s15, 0
    %p54 = por %p52, %p53
    %s55 = ssub.s32 %s16, %s28
    %p56 = scmp.eq.s32.totalorder %s55, 0
    %s58 = sadd.s32 %s57, 1
    %s59 = scalar_select %p56, %s57, %s58
    %p62 = pneg %p56
    %p63 = scmp.eq.s32.totalorder %s9, 1
    %p64 = por %p62, %p63
    %p65 = scmp.ne.s32.totalorder %s57, %s60
    %p66 = scmp.eq.s32.totalorder %s9, 0
    %p67 = por %p65, %p66
    %p68 = scmp.ne.s32.totalorder %s57, %s60
    %p69 = scmp.eq.s32.totalorder %s14, 1
    %p70 = por %p68, %p69
    %p71 = scmp.ne.s32.totalorder %s60, %s61
    %p72 = scmp.eq.s32.totalorder %s14, 0
    %p73 = por %p71, %p72
    %p74 = scmp.ne.s32.totalorder %s60, %s61
    %p75 = scmp.eq.s32.totalorder %s15, 1
    %p76 = por %p74, %p75
    %p78 = scmp.ne.s32.totalorder %s61, %s77
    %p79 = scmp.eq.s32.totalorder %s15, 0
    %p80 = por %p78, %p79
    %s81 = ssub.s32 %s16, %s28
    %p82 = scmp.eq.s32.totalorder %s81, 0
    %s84 = sadd.s32 %s83, 1
    %s85 = scalar_select %p82, %s83, %s84
    %p88 = pneg %p82
    %p89 = scmp.eq.s32.totalorder %s9, 1
    %p90 = por %p88, %p89
    %p91 = scmp.ne.s32.totalorder %s83, %s86
    %p92 = scmp.eq.s32.totalorder %s9, 0
    %p93 = por %p91, %p92
    %p94 = scmp.ne.s32.totalorder %s83, %s86
    %p95 = scmp.eq.s32.totalorder %s14, 1
    %p96 = por %p94, %p95
    %p97 = scmp.ne.s32.totalorder %s86, %s87
    %p98 = scmp.eq.s32.totalorder %s14, 0
    %p99 = por %p97, %p98
    %p100 = scmp.ne.s32.totalorder %s86, %s87
    %p101 = scmp.eq.s32.totalorder %s15, 1
    %p102 = por %p100, %p101
    %p104 = scmp.ne.s32.totalorder %s87, %s103
    %p105 = scmp.eq.s32.totalorder %s15, 0
    %p106 = por %p104, %p105
    %s107 = ssub.s32 %s17, %s24
    %s108 = ssub.s32 %s16, %s28
    %s109 = sor.u32 %s107, %s108
    %p110 = scmp.eq.s32.totalorder %s109, 0
    %s112 = sadd.s32 %s111, 1
    %s113 = scalar_select %p110, %s111, %s112
    %p116 = pneg %p110
    %p117 = scmp.eq.s32.totalorder %s9, 1
    %p118 = por %p116, %p117
    %p119 = scmp.ne.s32.totalorder %s111, %s114
    %p120 = scmp.eq.s32.totalorder %s9, 0
    %p121 = por %p119, %p120
    %p122 = scmp.ne.s32.totalorder %s111, %s114
    %p123 = scmp.eq.s32.totalorder %s14, 1
    %p124 = por %p122, %p123
    %p125 = scmp.ne.s32.totalorder %s114, %s115
    %p126 = scmp.eq.s32.totalorder %s14, 0
    %p127 = por %p125, %p126
    %p128 = scmp.ne.s32.totalorder %s114, %s115
    %p129 = scmp.eq.s32.totalorder %s15, 1
    %p130 = por %p128, %p129
    %p132 = scmp.ne.s32.totalorder %s115, %s131
    %p133 = scmp.eq.s32.totalorder %s15, 0
    %p134 = por %p132, %p133
    %p135 = scmp.le.s32.totalorder 1, %s9
    %p136 = scmp.lt.s32.totalorder %s9, 3
    %p137 = pnand %p135, %p136
    %p138 = pneg %p137
    // Predicated region
    $region9: #{multiscale_discriminator_forward.9} parent=5 // pred_check
      _
    $region10: #{multiscale_discriminator_forward.9} parent=5 // pred_check_branch
      %140 = sbr.rel (%p137) target = $region12
    $region11: #{multiscale_discriminator_forward.9} parent=5 // pred_region
      %s141 = ssub.s32 %s9, 1
      // Predicated region
      $region13: #{multiscale_discriminator_forward.9} parent=11 // pred_check
        %p142 = pneg %p73
      $region14: #{multiscale_discriminator_forward.9} parent=11 // pred_check_branch
        %144 = sbr.rel (%p142) target = $region16
      $region15: #{multiscale_discriminator_forward.9} parent=11 // pred_region
        %p145 = scmp.lt.s32.totalorder %s18, 0
        %s146 = scalar_select %p145, %s18, 0
        %s147 = smul.addr %s146, 4
        %s148 = scalar_lea.vmem %s1, %s147
      $region16: #{multiscale_discriminator_forward.9} parent=11 // pred_fallthru
        _
      // Predicated region
      $region17: #{multiscale_discriminator_forward.9} parent=11 // pred_check
        %p149 = pneg %p99
      $region18: #{multiscale_discriminator_forward.9} parent=11 // pred_check_branch
        %151 = sbr.rel (%p149) target = $region20
      $region19: #{multiscale_discriminator_forward.9} parent=11 // pred_region
        %p152 = scmp.lt.s32.totalorder %s18, 0
        %s153 = scalar_select %p152, %s18, 0
        %s154 = scalar_lea.vmem %s2, %s153
      $region20: #{multiscale_discriminator_forward.9} parent=11 // pred_fallthru
        _
    $region12: #{multiscale_discriminator_forward.9} parent=5 // pred_fallthru
      _
    %p155 = scmp.lt.s32.totalorder %s9, 2
    // Predicated region
    $region21: #{multiscale_discriminator_forward.9} parent=5 // pred_check
      %p156 = pneg %p155
    $region22: #{multiscale_discriminator_forward.9} parent=5 // pred_check_branch
      %158 = sbr.rel (%p156) target = $region24
    $region23: #{multiscale_discriminator_forward.9} parent=5 // pred_region
      // Predicated region
      $region25: #{multiscale_discriminator_forward.9} parent=23 // pred_check
        %p159 = pneg %p41
      $region26: #{multiscale_discriminator_forward.9} parent=23 // pred_check_branch
        %161 = sbr.rel (%p159) target = $region28
      $region27: #{multiscale_discriminator_forward.9} parent=23 // pred_region
        %s162 = smul.u32 2, %s17
        %p163 = scmp.lt.s32.totalorder %s162, 3
        %s164 = scalar_select %p163, %s162, 3
        %s165 = smul.addr %s164, 4
        %s166 = scalar_lea.vmem %s0, %s165
        %s167 = smul.u32 2, %s17
      $region28: #{multiscale_discriminator_forward.9} parent=23 // pred_fallthru
        _
    $region24: #{multiscale_discriminator_forward.9} parent=5 // pred_fallthru
      _
    %p168 = scmp.le.s32.totalorder 1, %s9
    %p169 = scmp.lt.s32.totalorder %s9, 3
    %p170 = pnand %p168, %p169
    %p171 = pneg %p170
    // Predicated region
    $region29: #{multiscale_discriminator_forward.9} parent=5 // pred_check
      _
    $region30: #{multiscale_discriminator_forward.9} parent=5 // pred_check_branch
      %173 = sbr.rel (%p170) target = $region32
    $region31: #{multiscale_discriminator_forward.9} parent=5 // pred_region
      %s174 = ssub.s32 %s9, 1
      %s175 = smul.u32 2, %s19
      %p176 = scmp.lt.s32.totalorder %s175, 3
      %s177 = scalar_select %p176, %s175, 3
      %s178 = smul.addr %s177, 4
      %s179 = scalar_lea.vmem %s0, %s178
      %p180 = pneg %p47
      %p181 = pneg %p44
      %p182 = scmp.lt.s32.totalorder %s18, 0
      %s183 = scalar_select %p182, %s18, 0
      %s184 = smul.addr %s183, 4
      %s185 = scalar_lea.vmem %s1, %s184
      %p186 = pneg %p73
      %p187 = pneg %p70
      %p188 = scmp.lt.s32.totalorder %s18, 0
      %s189 = scalar_select %p188, %s18, 0
      %s190 = scalar_lea.vmem %s2, %s189
      %p191 = pneg %p99
      %p192 = pneg %p96
      %p193 = pneg %p127
      %p194 = pneg %p124
      %s195 = smul.u32 2, %s19
      %p196 = scmp.lt.s32.totalorder %s195, 3
      %s197 = scalar_select %p196, %s195, 3
      %p198 = scmp.lt.s32.totalorder %s18, 0
      %s199 = scalar_select %p198, %s18, 0
      %s200 = sadd.s32 %s199, %s197
      %s201 = smul.addr %s200, 4
      %s202 = scalar_lea.vmem %s3, %s201
      %s203 = smul.u32 2, %s19
      %p204 = scmp.lt.s32.totalorder %s203, 3
      %s205 = scalar_select %p204, %s203, 3
      %s206 = smul.addr %s205, 4
      %s207 = scalar_lea.vmem %s0, %s206
      %s208 = smul.u32 2, %s19
      %p209 = scmp.lt.s32.totalorder %s18, 0
      %s210 = scalar_select %p209, %s18, 0
      %s211 = smul.addr %s210, 4
      %s212 = scalar_lea.vmem %s1, %s211
      %p213 = scmp.lt.s32.totalorder %s18, 0
      %s214 = scalar_select %p213, %s18, 0
      %s215 = scalar_lea.vmem %s2, %s214
      %s216 = smul.u32 2, %s19
      %p217 = scmp.lt.s32.totalorder %s216, 3
      %s218 = scalar_select %p217, %s216, 3
      %p219 = scmp.lt.s32.totalorder %s18, 0
      %s220 = scalar_select %p219, %s18, 0
      %s221 = sadd.s32 %s220, %s218
      %s222 = smul.addr %s221, 4
      %s223 = scalar_lea.vmem %s3, %s222
      %s224 = smul.u32 2, %s19
      %v226 = vld [vmem:[%s207] sm:$0xf]
      %v227 = vld [vmem:[%s207 + $0x4] sm:$0xf]
      %v228 = vld [vmem:[%s212] sm:$0xf]
      %v229 = vld [vmem:[%s212 + $0x4] sm:$0xf]
      %v230 = vld [vmem:[%s212 + $0x8] sm:$0xf]
      %v231 = vld [vmem:[%s212 + $0xc] sm:$0xf]
      %v232 = vld [vmem:[%s212 + $0x10] sm:$0xf]
      %v233 = vld [vmem:[%s212 + $0x14] sm:$0xf]
      %v234 = vld [vmem:[%s212 + $0x18] sm:$0xf]
      %v235 = vld [vmem:[%s212 + $0x1c] sm:$0xf]
      %v236 = vld [vmem:[%s212 + $0x20] sm:$0xf]
      %v237 = vld [vmem:[%s212 + $0x24] sm:$0xf]
      %v238 = vld [vmem:[%s212 + $0x28] sm:$0xf]
      %v239 = vld [vmem:[%s212 + $0x2c] sm:$0xf]
      %v240 = vld [vmem:[%s212 + $0x30] sm:$0xf]
      %v241 = vld [vmem:[%s212 + $0x34] sm:$0xf]
      %v242 = vld [vmem:[%s212 + $0x38] sm:$0xf]
      %v243 = vld [vmem:[%s212 + $0x3c] sm:$0xf]
      %v244 = vld [vmem:[%s215] sm:$0x1]
      %v246 = vlaneseq
      %v247 = vshrl.u32 %v246, 7
      %v248 = vsub.s32 0, %v247
      %v249 = vrot.slane %v244, %v248
      %v253 = vunpack.c.l.b16 %v226
      %v254 = vunpack.c.l.b16 %v227
      %v255 = vpack.c.b16 %v254, %v253
      %v273 = vunpack.c.l.b16 %v228
      %v274 = vunpack.c.l.b16 %v229
      %v275 = vunpack.c.l.b16 %v230
      %v276 = vunpack.c.l.b16 %v231
      %v277 = vunpack.c.l.b16 %v232
      %v278 = vunpack.c.l.b16 %v233
      %v279 = vunpack.c.l.b16 %v234
      %v280 = vunpack.c.l.b16 %v235
      %v281 = vunpack.c.l.b16 %v236
      %v282 = vunpack.c.l.b16 %v237
      %v283 = vunpack.c.l.b16 %v238
      %v284 = vunpack.c.l.b16 %v239
      %v285 = vunpack.c.l.b16 %v240
      %v286 = vunpack.c.l.b16 %v241
      %v287 = vunpack.c.l.b16 %v242
      %v288 = vunpack.c.l.b16 %v243
      %v289 = vpack.c.b16 %v274, %v273
      %v290 = vpack.c.b16 %v276, %v275
      %v291 = vpack.c.b16 %v278, %v277
      %v292 = vpack.c.b16 %v280, %v279
      %v293 = vpack.c.b16 %v282, %v281
      %v294 = vpack.c.b16 %v284, %v283
      %v295 = vpack.c.b16 %v286, %v285
      %v296 = vpack.c.b16 %v288, %v287
      %305 = vmatprep.subr.bf16.mxu0 0
      %306 = vmatpush1.bf16.msra.mxu0 %v289
      %307 = vmatprep.subr.bf16.mxu0 0
      %308 = vmatpush1.bf16.msra.mxu0 %v290
      %309 = vmatprep.subr.bf16.mxu0 0
      %310 = vmatpush1.bf16.msra.mxu0 %v291
      %311 = vmatprep.subr.bf16.mxu0 0
      %312 = vmatpush1.bf16.msra.mxu0 %v292
      %313 = vmatprep.subr.bf16.mxu0 0
      %314 = vmatpush1.bf16.msra.mxu0 %v293
      %315 = vmatprep.subr.bf16.mxu0 0
      %316 = vmatpush1.bf16.msra.mxu0 %v294
      %317 = vmatprep.subr.bf16.mxu0 0
      %318 = vmatpush1.bf16.msra.mxu0 %v295
      %319 = vmatprep.subr.bf16.mxu0 0
      %320 = vmatpush1.bf16.msra.mxu0 %v296
      %321 = vmatprep.subr.bf16.mxu0 0
      %322 = vmatpush1.bf16.msra.mxu0 0
      %323 = vmatprep.subr.bf16.mxu0 0
      %324 = vmatpush1.bf16.msra.mxu0 0
      %325 = vmatprep.subr.bf16.mxu0 0
      %326 = vmatpush1.bf16.msra.mxu0 0
      %327 = vmatprep.subr.bf16.mxu0 0
      %328 = vmatpush1.bf16.msra.mxu0 0
      %329 = vmatprep.subr.bf16.mxu0 0
      %330 = vmatpush1.bf16.msra.mxu0 0
      %331 = vmatprep.subr.bf16.mxu0 0
      %332 = vmatpush1.bf16.msra.mxu0 0
      %333 = vmatprep.subr.bf16.mxu0 0
      %334 = vmatpush1.bf16.msra.mxu0 0
      %335 = vmatprep.subr.bf16.mxu0 0
      %336 = vmatpush1.bf16.msra.mxu0 0
      %337 = vmatprep.mubr.bf16.mxu0 0
      %338 = vmatmul.mubr.bf16.gmra.mrb[0].mxu0 %v255
      %v339 = vpop.f32.mrb[0].mxu0
      %v340 = vadd.f32 %v249, %v339
      %v341 = vpop.f32.mrb[0].mxu0
      %v342 = vpop.f32.mrb[0].mxu0
      %v343 = vadd.f32 %v249, %v342
      %v344 = vpop.f32.mrb[0].mxu0
      %345 = vdwg.mxu0
      %v346 = vadd.f32 %v340, %v343
      %v347 = vrot.slane %v346, 4
      %v348 = vadd.f32 %v346, %v347
      %v349 = vrot.slane %v348, 2
      %v350 = vadd.f32 %v348, %v349
      %v351 = vrot.slane %v350, 1
      %v352 = vadd.f32 %v350, %v351
      %v353 = vrcp.pop 16.0
      %v354 = vmul.f32 %v352, %v353
      %v355 = vsub.f32 %v340, %v354
      %v356 = vsub.f32 %v343, %v354
      %v357 = vmul.f32 %v355, %v355
      %v358 = vmul.f32 %v356, %v356
      %v359 = vadd.f32 %v357, %v358
      %v360 = vrot.slane %v359, 4
      %v361 = vadd.f32 %v359, %v360
      %v362 = vrot.slane %v361, 2
      %v363 = vadd.f32 %v361, %v362
      %v364 = vrot.slane %v363, 1
      %v365 = vadd.f32 %v363, %v364
      %v366 = vmul.f32 %v365, %v353
      %v367 = vadd.f32 %v366, 1e-05
      %v368 = vrsqrt.pop %v367
      %v369 = vmul.f32 %v355, %v368
      %v370 = vmul.f32 %v356, %v368
      %vm371 = vcmp.gt.f32.partialorder %v369, 0.0
      %vm372 = vcmp.gt.f32.partialorder %v370, 0.0
      %v373 = vmul.f32 %v369, 0.2
      %v374 = vmul.f32 %v370, 0.2
      %v375 = vsel %vm371, %v369, %v373
      %v376 = vsel %vm372, %v370, %v374
      %v377 = vpack.c.bf16 %v376, %v375
      %v379 = vunpack.c.l.b16 %v377
      %v380 = vunpack.c.h.b16 %v377
      %v381 = vpack.c.b16 %v379, %v379
      %v382 = vpack.c.b16 %v380, %v380
      %385 = vst [vmem:[%s223] sm:$0xf] %v381
      %386 = vst [vmem:[%s223 + $0x4] sm:$0xf] %v382
      %s387 = smul.u32 2, %s19
      %p388 = scmp.lt.s32.totalorder %s387, 3
      %s389 = scalar_select %p388, %s387, 3
      %p390 = scmp.lt.s32.totalorder %s18, 0
      %s391 = scalar_select %p390, %s18, 0
      %s392 = sadd.s32 %s391, %s389
      %s393 = smul.addr %s392, 4
      %s394 = scalar_lea.vmem %s3, %s393
      // Predicated region
      $region33: #{multiscale_discriminator_forward.9} parent=31 // pred_check
        %p395 = pneg %p124
      $region34: #{multiscale_discriminator_forward.9} parent=31 // pred_check_branch
        %397 = sbr.rel (%p395) target = $region36
      $region35: #{multiscale_discriminator_forward.9} parent=31 // pred_region
        %s398 = smul.u32 2, %s19
      $region36: #{multiscale_discriminator_forward.9} parent=31 // pred_fallthru
        _
    $region32: #{multiscale_discriminator_forward.9} parent=5 // pred_fallthru
      _
    %p399 = scmp.le.s32.totalorder 2, %s9
    // Predicated region
    $region37: #{multiscale_discriminator_forward.9} parent=5 // pred_check
      %p400 = pneg %p399
    $region38: #{multiscale_discriminator_forward.9} parent=5 // pred_check_branch
      %402 = sbr.rel (%p400) target = $region40
    $region39: #{multiscale_discriminator_forward.9} parent=5 // pred_region
      %s403 = ssub.s32 %s9, 2
      // Predicated region
      $region41: #{multiscale_discriminator_forward.9} parent=39 // pred_check
        %p404 = pneg %p130
      $region42: #{multiscale_discriminator_forward.9} parent=39 // pred_check_branch
        %406 = sbr.rel (%p404) target = $region44
      $region43: #{multiscale_discriminator_forward.9} parent=39 // pred_region
        %s407 = smul.u32 2, %s21
        %p408 = scmp.lt.s32.totalorder %s407, 3
        %s409 = scalar_select %p408, %s407, 3
        %p410 = scmp.lt.s32.totalorder %s20, 0
        %s411 = scalar_select %p410, %s20, 0
        %s412 = sadd.s32 %s411, %s409
        %s413 = smul.addr %s412, 4
        %s414 = scalar_lea.vmem %s3, %s413
      $region44: #{multiscale_discriminator_forward.9} parent=39 // pred_fallthru
        _
    $region40: #{multiscale_discriminator_forward.9} parent=5 // pred_fallthru
      _
  $region6: #{multiscale_discriminator_forward.9} parent=0 // loop_footer
    %s13 = sadd.s32 1, %s9
  $region7: #{multiscale_discriminator_forward.9} parent=0 // loop_footer_branch
    %8 = sbr.rel target = $region3
  $region8: #{multiscale_discriminator_forward.9} parent=0 // loop_exit
    _

</llo_original>
